<compile_context>
chip_gen: v7x
topology: tpu7x:2x2x1
jax: 0.10.0
libtpu: 0.0.40
codegen_flags: <defaults>
</compile_context>

<pallas_src>
import functools
import math

import jax
import jax.numpy as jnp
from jax import lax
from jax.experimental import pallas as pl
from jax.experimental.pallas import tpu as pltpu


# --------------------------------------------------------------------------- #
# Kernel
# --------------------------------------------------------------------------- #
def _fusion_kernel(aux_ref, esti_ref,
                   wq_ref, wkvf_ref, wo_t_ref, wfa_ref,
                   mskh_ref, expd_ref, bcol_ref, brow_ref,
                   out_ref,
                   vec_scr, hst_scr, fe_scr,
                   *, C, nh_pad, tl, L, needs_mask):
    phase = pl.program_id(1)          # 0 = attention + Wfe@x caching, 1 = fusion store
    t = pl.program_id(2)              # L-tile index
    n_lt = pl.num_programs(2)
    f32 = jnp.float32

    # ---------------- phase 0: attention over L tiles (single esti pass) ------
    @pl.when(phase == 0)
    def _attention():
        x = esti_ref[0]               # (C, tl) bf16, channels-major / lane-dense
        bcol = bcol_ref[...]          # (C, 8) f32: cols 0..3 = bq*scale, bk, bv, b_conv
        aux_row = aux_ref[0]          # (1, C) f32

        @pl.when(t == 0)
        def _init():
            # q = (Wq*scale) @ aux + bq*scale  (broadcast-multiply + lane reduce)
            wq = wq_ref[...].astype(f32)
            vec_scr[:, 0:1] = jnp.sum(wq * aux_row, axis=1, keepdims=True) + bcol[:, 0:1]
            vec_scr[:, 1:2] = jnp.zeros((C, 1), f32)                   # acc
            hst_scr[:, 0:1] = jnp.full((nh_pad, 1), -jnp.inf, f32)     # running max / head
            hst_scr[:, 1:2] = jnp.zeros((nh_pad, 1), f32)              # running sum / head

        # fused projection: [Wk; Wv; Wfe] @ x on the MXU, f32 accumulation.
        kvf = jnp.dot(wkvf_ref[...], x, preferred_element_type=f32)    # (3C, tl)
        kt = kvf[0:C, :] + bcol[:, 1:2]                                # (C, tl)
        vt = kvf[C:2 * C, :] + bcol[:, 2:3]                            # (C, tl)
        fe_scr[t] = kvf[2 * C:3 * C, :].astype(jnp.bfloat16)           # cache Wfe@x tile

        # compact per-head scores: (nh, C) one-hot bf16 @ (C, tl) bf16 -> (nh, tl)
        q = vec_scr[:, 0:1]
        scores = jnp.dot(mskh_ref[...], (kt * q).astype(jnp.bfloat16),
                         preferred_element_type=f32)
        if needs_mask:  # static: only when L was zero-padded up to a multiple of 128
            col = t * tl + lax.broadcasted_iota(jnp.int32, (1, tl), 1)
            scores = jnp.where(col < L, scores, -jnp.inf)

        # online softmax in compact (nh, .) form (8x less exp / reduce work).
        m_prev = hst_scr[:, 0:1]
        l_prev = hst_scr[:, 1:2]
        m_new = jnp.maximum(m_prev, jnp.max(scores, axis=1, keepdims=True))
        corr = jnp.exp(m_prev - m_new)                                 # (nh, 1)
        p = jnp.exp(scores - m_new)                                    # (nh, tl)
        hst_scr[:, 0:1] = m_new
        hst_scr[:, 1:2] = corr * l_prev + jnp.sum(p, axis=1, keepdims=True)

        # expand per-head quantities back to channels with the exact one-hot E.
        expd_b = expd_ref[...]                                         # (C, nh) bf16 one-hot
        p_full = jnp.dot(expd_b, p.astype(jnp.bfloat16),
                         preferred_element_type=f32)                   # (C, tl)
        corr_c = jnp.dot(expd_b.astype(f32), corr,
                         preferred_element_type=f32)                   # (C, 1)
        vec_scr[:, 1:2] = (corr_c * vec_scr[:, 1:2]
                           + jnp.sum(vt * p_full, axis=1, keepdims=True))

        @pl.when(t == n_lt - 1)
        def _finalize():
            brow = brow_ref[...]                                       # (8, C): 0 = bo, 1 = alpha
            inv_l = 1.0 / hst_scr[:, 1:2]                              # exact; per-head, tiny
            inv_l_c = jnp.dot(expd_b.astype(f32), inv_l, preferred_element_type=f32)
            attn = vec_scr[:, 1:2] * inv_l_c                           # (C, 1)
            # out_proj as a row: attn_out[co] = sum_ci Wo[co, ci] * attn[ci] + bo
            wo_t = wo_t_ref[...].astype(f32)
            attn_out = jnp.sum(wo_t * attn, axis=0, keepdims=True) + brow[0:1, :]
            aux_new = aux_row + brow[1:2, :] * attn_out                # (1, C)
            # aux half of the 1x1 conv + conv bias collapsed into one column.
            wfa = wfa_ref[...].astype(f32)
            vec_scr[:, 2:3] = (jnp.sum(wfa * aux_new, axis=1, keepdims=True)
                               + bcol[:, 3:4])                         # fcol (C, 1)

    # ---------------- phase 1: stream cached Wfe@x + fcol to the output -------
    # Output blocks are only written here; during phase 0 the output block index
    # is pinned to tile 0, which phase 1 (t == 0) fully overwrites before any
    # index change (and hence any writeback) can occur.
    @pl.when(phase == 1)
    def _fusion():
        out = fe_scr[t].astype(f32) + vec_scr[:, 2:3]                  # (C, tl)
        out_ref[0] = out.astype(out_ref.dtype)


# --------------------------------------------------------------------------- #
# Wrapper
# --------------------------------------------------------------------------- #
def _largest_tile(L_pad, cap):
    """Largest multiple of 128 that divides L_pad and is <= cap (L_pad % 128 == 0)."""
    tl = max(128, (min(cap, L_pad) // 128) * 128)
    while L_pad % tl:
        tl -= 128
    return tl


def fusion_forward(aux, esti, params, *, tile_l=4096):
    """aux: (B, C) f32, esti: (B, C, F, T) float -> (B, C, F, T) bf16.

    tile_l: upper bound on the lane-dense L tile; sweep {2048, 4096, 8192, 16384}
    for large problems (the wrapper also caps it by the VMEM budget).
    """
    B, C, Fdim, T = esti.shape
    L = Fdim * T
    nh_pad = params["mskh"].shape[0]

    # ---- L padding (lane-dense tiles) + per-generation VMEM budgeting --------
    L_pad = ((L + 127) // 128) * 128
    needs_mask = L_pad != L

    try:
        vmem_cap = int(pltpu.get_tpu_info().vmem_capacity_bytes)      # 128 MiB v5e/v6e, 64 MiB v7x
    except Exception:
        vmem_cap = 64 * 1024 * 1024                                   # conservative default
    budget = int(vmem_cap * 0.7)

    # fixed VMEM: Wfe@x cache (bf16) + double-buffered weights/biases + slack
    weight_bytes = 2 * (6 * C * C * 2 + 2 * nh_pad * C * 2 + 16 * C * 4)
    fixed = C * L_pad * 2 + weight_bytes + 512 * 1024
    per_l = 2 * 2 * (C * 2)            # esti-in + out tiles, bf16, double-buffered
    cap = max(128, (budget - fixed) // per_l)
    tl = _largest_tile(L_pad, min(tile_l, cap))
    n_lt = L_pad // tl
    # TODO(synk): if the Wfe@x cache alone ever exceeds the VMEM budget (huge L),
    # fall back to a second esti pass instead of caching.
    vmem_limit = int(min(vmem_cap * 0.9, max(fixed + per_l * tl + (1 << 20), 32 << 20)))

    # NCHW -> (B, C, L) is a free reshape; activations travel as bf16.
    esti3 = esti.reshape(B, C, L).astype(jnp.bfloat16)
    if needs_mask:
        esti3 = jnp.pad(esti3, ((0, 0), (0, 0), (0, L_pad - L)))
    aux3 = aux.astype(jnp.float32)[:, None, :]                         # (B, 1, C)

    kernel = functools.partial(_fusion_kernel, C=C, nh_pad=nh_pad, tl=tl,
                               L=L, needs_mask=needs_mask)

    def w_spec(shape):
        return pl.BlockSpec(shape, lambda b, p, t: (0,) * len(shape))

    grid = (B, 2, n_lt)                # (batch, phase: 0=attention 1=fusion, L tile)
    last_t = n_lt - 1

    out3 = pl.pallas_call(
        kernel,
        out_shape=jax.ShapeDtypeStruct((B, C, L_pad), jnp.bfloat16),
        grid_spec=pltpu.PrefetchScalarGridSpec(
            num_scalar_prefetch=0,
            grid=grid,
            in_specs=[
                pl.BlockSpec((1, 1, C), lambda b, p, t: (b, 0, 0)),            # aux (f32)
                # esti is streamed exactly once (phase 0); during phase 1 the block
                # index stays pinned on the last phase-0 tile -> no re-DMA.
                pl.BlockSpec((1, C, tl),
                             lambda b, p, t: (b, 0, t * (1 - p) + last_t * p)),
                w_spec((C, C)),          # Wq * 1/sqrt(hd)       (bf16)
                w_spec((3 * C, C)),      # [Wk; Wv; Wfe]          (bf16)
                w_spec((C, C)),          # Wo^T                   (bf16)
                w_spec((C, C)),          # Wfa (conv aux half)    (bf16)
                w_spec((nh_pad, C)),     # per-head one-hot mask  (bf16, exact)
                w_spec((C, nh_pad)),     # head expansion E       (bf16, exact)
                w_spec((C, 8)),          # packed cols: bq*scale, bk, bv, b_conv (f32)
                w_spec((8, C)),          # packed rows: bo, alpha                (f32)
            ],
            out_specs=pl.BlockSpec((1, C, tl), lambda b, p, t: (b, 0, p * t)),
            scratch_shapes=[
                pltpu.VMEM((C, 8), jnp.float32),         # col0=q, col1=acc, col2=fcol
                pltpu.VMEM((nh_pad, 2), jnp.float32),    # col0=running max, col1=running sum
                pltpu.VMEM((n_lt, C, tl), jnp.bfloat16), # Wfe@x cache (single esti pass)
            ],
        ),
        compiler_params=pltpu.CompilerParams(
            dimension_semantics=("parallel", "arbitrary", "arbitrary"),
            vmem_limit_bytes=vmem_limit),
        # TODO(synk): on v7x, constant-index weight inputs could be single-buffered
        # (pipeline_mode=pl.Buffered(1)); for B == 1 the phase-1 tile axis could be
        # made the megacore-parallel axis.  Not needed at these sizes.
    )(aux3, esti3,
      params["wq"], params["wkvf"], params["wo_t"], params["wfa"],
      params["mskh"], params["expd"], params["bcol"], params["brow"])

    if needs_mask:
        out3 = out3[:, :, :L]
    return out3.reshape(B, C, Fdim, T)


# --------------------------------------------------------------------------- #
# Parameters + pure-JAX reference (mirrors the PyTorch module in eval mode)
# --------------------------------------------------------------------------- #
def make_params(key, emb_dim, nhead):
    """Raw f32 params in PyTorch layouts (Linear/Conv weight = (out, in))."""
    C = emb_dim
    ks = jax.random.split(key, 8)
    s = 0.1
    wq = s * jax.random.normal(ks[0], (C, C), jnp.float32)
    wk = s * jax.random.normal(ks[1], (C, C), jnp.float32)
    wv = s * jax.random.normal(ks[2], (C, C), jnp.float32)
    bqkv = s * jax.random.normal(ks[3], (3, C), jnp.float32)
    wo = s * jax.random.normal(ks[4], (C, C), jnp.float32)
    bo = s * jax.random.normal(ks[5], (C,), jnp.float32)
    conv_w = s * jax.random.normal(ks[6], (C, 2 * C), jnp.float32)
    conv_b = s * jax.random.normal(ks[7], (C,), jnp.float32)
    # NOTE: the PyTorch module initializes alpha to zeros; a non-zero value is used
    # here (harness only) so the attention path is numerically exercised.
    alpha = 0.05 * jnp.ones((C,), jnp.float32)
    return {"wq": wq, "wk": wk, "wv": wv,
            "bq": bqkv[0], "bk": bqkv[1], "bv": bqkv[2],
            "wo": wo, "bo": bo, "alpha": alpha,
            "conv_w": conv_w, "conv_b": conv_b}


def pack_params(raw, nhead):
    """Pack raw params into the kernel's fused bf16 layout."""
    C = raw["wq"].shape[0]
    hd = C // nhead
    nh_pad = ((nhead + 7) // 8) * 8
    scale = 1.0 / math.sqrt(hd)
    head = jnp.arange(C) // hd
    onehot = (head[None, :] == jnp.arange(nh_pad)[:, None]).astype(jnp.float32)  # (nh_pad, C)
    bf16 = jnp.bfloat16
    z = jnp.zeros((C,), jnp.float32)
    return {
        # 1/sqrt(hd) folded into Wq / bq so the head mask stays an exact 0/1 one-hot.
        "wq": (raw["wq"] * scale).astype(bf16),
        "wkvf": jnp.concatenate([raw["wk"], raw["wv"], raw["conv_w"][:, :C]],
                                axis=0).astype(bf16),                 # (3C, C)
        "wo_t": raw["wo"].T.astype(bf16),
        "wfa": raw["conv_w"][:, C:].astype(bf16),
        "mskh": onehot.astype(bf16),                                  # (nh_pad, C)
        "expd": onehot.T.astype(bf16),                                # (C, nh_pad)
        "bcol": jnp.stack([raw["bq"] * scale, raw["bk"], raw["bv"], raw["conv_b"],
                           z, z, z, z], axis=1),                      # (C, 8) f32
        "brow": jnp.stack([raw["bo"], raw["alpha"], z, z, z, z, z, z], axis=0),  # (8, C) f32
    }


def reference_forward(aux, esti, raw, nhead):
    """Pure-JAX reference (bf16 matmul inputs, f32 accumulation, f32 output)."""
    B, C, Fdim, T = esti.shape
    L, hd = Fdim * T, C // nhead
    f32, bf16 = jnp.float32, jnp.bfloat16
    xb = jnp.transpose(esti.reshape(B, C, L), (0, 2, 1)).astype(bf16)       # (B, L, C)
    aux3 = aux[:, None, :].astype(f32)                                      # (B, 1, C)
    wq = raw["wq"].astype(bf16).astype(f32)
    q = aux3 @ wq.T + raw["bq"]
    k = jnp.einsum('blc,dc->bld', xb, raw["wk"].astype(bf16),
                   preferred_element_type=f32) + raw["bk"]
    v = jnp.einsum('blc,dc->bld', xb, raw["wv"].astype(bf16),
                   preferred_element_type=f32) + raw["bv"]
    qh = q.reshape(B, 1, nhead, hd).transpose(0, 2, 1, 3)
    kh = k.reshape(B, L, nhead, hd).transpose(0, 2, 1, 3)
    vh = v.reshape(B, L, nhead, hd).transpose(0, 2, 1, 3)
    scores = jnp.einsum('bhqd,bhkd->bhqk', qh, kh) / math.sqrt(hd)
    p = jax.nn.softmax(scores, axis=-1)
    o = jnp.einsum('bhqk,bhkd->bhqd', p, vh).transpose(0, 2, 1, 3).reshape(B, 1, C)
    wo = raw["wo"].astype(bf16).astype(f32)
    attn_out = o @ wo.T + raw["bo"]
    aux_new = aux3 + raw["alpha"] * attn_out                                # (B, 1, C)
    wfe = raw["conv_w"][:, :C].astype(bf16)
    wfa = raw["conv_w"][:, C:].astype(bf16).astype(f32)
    out = (jnp.einsum('blc,dc->bld', xb, wfe, preferred_element_type=f32)
           + aux_new @ wfa.T + raw["conv_b"])                               # (B, L, C)
    return jnp.transpose(out, (0, 2, 1)).reshape(B, C, Fdim, T).astype(f32)


if __name__ == "__main__":
    B, C, Fdim, T = 2, 32, 8, 32          # L = F*T = 256
    nhead = 4

    key = jax.random.PRNGKey(0)
    k_aux, k_esti, k_par = jax.random.split(key, 3)
    aux = jax.random.normal(k_aux, (B, C), jnp.float32)
    esti = jax.random.normal(k_esti, (B, C, Fdim, T), jnp.float32).astype(jnp.bfloat16)

    raw = make_params(k_par, C, nhead)
    kparams = pack_params(raw, nhead)
    ref = reference_forward(aux, esti, raw, nhead)

    # tile_l=128 exercises the multi-tile online-softmax + Wfe@x-cache path;
    # the default (large) tile exercises the single-tile production path.
    for tl in (128, 4096):
        out = jax.block_until_ready(fusion_forward(aux, esti, kparams, tile_l=tl))
        assert out.shape == (B, C, Fdim, T)
        assert out.dtype == jnp.bfloat16
        err = float(jnp.max(jnp.abs(out.astype(jnp.float32) - ref)))
        ok = jnp.allclose(out.astype(jnp.float32), ref, rtol=2e-2, atol=2e-2)
        assert bool(ok), f"tile_l={tl}: max abs err {err}"

    print("KERNEL_OK")
</pallas_src>

<mosaic_0001>
module attributes {stable_mosaic.version = 11 : i64} {
  func.func @_fusion_kernel(%arg0: i32, %arg1: i32, %arg2: i32, %arg3: memref<1x1x32xf32, #tpu.memory_space<vmem>>, %arg4: memref<1x32x128xbf16, #tpu.memory_space<vmem>>, %arg5: memref<32x32xbf16, #tpu.memory_space<vmem>>, %arg6: memref<96x32xbf16, #tpu.memory_space<vmem>>, %arg7: memref<32x32xbf16, #tpu.memory_space<vmem>>, %arg8: memref<32x32xbf16, #tpu.memory_space<vmem>>, %arg9: memref<8x32xbf16, #tpu.memory_space<vmem>>, %arg10: memref<32x8xbf16, #tpu.memory_space<vmem>>, %arg11: memref<32x8xf32, #tpu.memory_space<vmem>>, %arg12: memref<8x32xf32, #tpu.memory_space<vmem>>, %arg13: memref<1x32x128xbf16, #tpu.memory_space<vmem>>, %arg14: memref<32x8xf32, #tpu.memory_space<vmem>>, %arg15: memref<8x2xf32, #tpu.memory_space<vmem>>, %arg16: memref<2x32x128xbf16, #tpu.memory_space<vmem>>) attributes {dimension_semantics = [#tpu.dimension_semantics<parallel>, #tpu.dimension_semantics<arbitrary>, #tpu.dimension_semantics<arbitrary>], iteration_bounds = array<i64: 2, 2, 2>, scalar_prefetch = 0 : i64, scratch_operands = 3 : i64, tpu.core_type = #tpu.core_type<tc>, window_params = [{transform_indices = @transform_0, window_bounds = array<i64: 1, 1, 32>}, {transform_indices = @transform_1, window_bounds = array<i64: 1, 32, 128>}, {pipeline_mode = #tpu.pipeline_mode<synchronous>, transform_indices = @transform_2, window_bounds = array<i64: 32, 32>}, {pipeline_mode = #tpu.pipeline_mode<synchronous>, transform_indices = @transform_3, window_bounds = array<i64: 96, 32>}, {pipeline_mode = #tpu.pipeline_mode<synchronous>, transform_indices = @transform_4, window_bounds = array<i64: 32, 32>}, {pipeline_mode = #tpu.pipeline_mode<synchronous>, transform_indices = @transform_5, window_bounds = array<i64: 32, 32>}, {pipeline_mode = #tpu.pipeline_mode<synchronous>, transform_indices = @transform_6, window_bounds = array<i64: 8, 32>}, {pipeline_mode = #tpu.pipeline_mode<synchronous>, transform_indices = @transform_7, window_bounds = array<i64: 32, 8>}, {pipeline_mode = #tpu.pipeline_mode<synchronous>, transform_indices = @transform_8, window_bounds = array<i64: 32, 8>}, {pipeline_mode = #tpu.pipeline_mode<synchronous>, transform_indices = @transform_9, window_bounds = array<i64: 8, 32>}, {transform_indices = @transform_10, window_bounds = array<i64: 1, 32, 128>}]} {
    %c0_i32 = arith.constant 0 : i32
    %0 = arith.cmpi eq, %arg1, %c0_i32 : i32
    %1 = arith.extui %0 : i1 to i32
    %c0_i32_0 = arith.constant 0 : i32
    %2 = arith.cmpi ne, %1, %c0_i32_0 : i32
    scf.if %2 {
      %c0 = arith.constant 0 : index
      %c0_2 = arith.constant 0 : index
      %c0_3 = arith.constant 0 : index
      %6 = vector.load %arg4[%c0, %c0_2, %c0_3] : memref<1x32x128xbf16, #tpu.memory_space<vmem>>, vector<1x32x128xbf16>
      %7 = vector.shape_cast %6 : vector<1x32x128xbf16> to vector<32x128xbf16>
      %c0_4 = arith.constant 0 : index
      %c0_5 = arith.constant 0 : index
      %8 = vector.load %arg11[%c0_4, %c0_5] : memref<32x8xf32, #tpu.memory_space<vmem>>, vector<32x8xf32>
      %c0_6 = arith.constant 0 : index
      %c0_7 = arith.constant 0 : index
      %c0_8 = arith.constant 0 : index
      %9 = vector.load %arg3[%c0_6, %c0_7, %c0_8] : memref<1x1x32xf32, #tpu.memory_space<vmem>>, vector<1x1x32xf32>
      %10 = vector.shape_cast %9 : vector<1x1x32xf32> to vector<1x32xf32>
      %c0_i32_9 = arith.constant 0 : i32
      %11 = arith.cmpi eq, %arg2, %c0_i32_9 : i32
      %12 = arith.extui %11 : i1 to i32
      %c0_i32_10 = arith.constant 0 : i32
      %13 = arith.cmpi ne, %12, %c0_i32_10 : i32
      scf.if %13 {
        %c0_40 = arith.constant 0 : index
        %c0_41 = arith.constant 0 : index
        %67 = vector.load %arg5[%c0_40, %c0_41] : memref<32x32xbf16, #tpu.memory_space<vmem>>, vector<32x32xbf16>
        %68 = arith.extf %67 : vector<32x32xbf16> to vector<32x32xf32>
        %69 = vector.broadcast %10 : vector<1x32xf32> to vector<32x32xf32>
        %70 = arith.mulf %68, %69 : vector<32x32xf32>
        %cst_42 = arith.constant dense<0.000000e+00> : vector<32xf32>
        %71 = vector.multi_reduction <add>, %70, %cst_42 [1] : vector<32x32xf32> to vector<32xf32>
        %72 = vector.shape_cast %71 : vector<32xf32> to vector<32x1xf32>
        %73 = vector.extract_strided_slice %8 {offsets = [0, 0], sizes = [32, 1], strides = [1, 1]} : vector<32x8xf32> to vector<32x1xf32>
        %74 = arith.addf %72, %73 : vector<32x1xf32>
        %c0_43 = arith.constant 0 : index
        %c0_44 = arith.constant 0 : index
        %75 = vector.load %arg14[%c0_43, %c0_44] : memref<32x8xf32, #tpu.memory_space<vmem>>, vector<32x1xf32>
        tpu.vector_store %arg14[%c0_43, %c0_44], %74 {strides = array<i32>} : memref<32x8xf32, #tpu.memory_space<vmem>>, vector<32x1xf32>,
        %cst_45 = arith.constant 0.000000e+00 : f32
        %76 = vector.broadcast %cst_45 : f32 to vector<32x1xf32>
        %c0_46 = arith.constant 0 : index
        %c1_47 = arith.constant 1 : index
        %77 = vector.load %arg14[%c0_46, %c1_47] : memref<32x8xf32, #tpu.memory_space<vmem>>, vector<32x1xf32>
        tpu.vector_store %arg14[%c0_46, %c1_47], %76 {strides = array<i32>} : memref<32x8xf32, #tpu.memory_space<vmem>>, vector<32x1xf32>,
        %cst_48 = arith.constant 0xFF800000 : f32
        %78 = vector.broadcast %cst_48 : f32 to vector<8x1xf32>
        %c0_49 = arith.constant 0 : index
        %c0_50 = arith.constant 0 : index
        %79 = vector.load %arg15[%c0_49, %c0_50] : memref<8x2xf32, #tpu.memory_space<vmem>>, vector<8x1xf32>
        tpu.vector_store %arg15[%c0_49, %c0_50], %78 {strides = array<i32>} : memref<8x2xf32, #tpu.memory_space<vmem>>, vector<8x1xf32>,
        %cst_51 = arith.constant 0.000000e+00 : f32
        %80 = vector.broadcast %cst_51 : f32 to vector<8x1xf32>
        %c0_52 = arith.constant 0 : index
        %c1_53 = arith.constant 1 : index
        %81 = vector.load %arg15[%c0_52, %c1_53] : memref<8x2xf32, #tpu.memory_space<vmem>>, vector<8x1xf32>
        tpu.vector_store %arg15[%c0_52, %c1_53], %80 {strides = array<i32>} : memref<8x2xf32, #tpu.memory_space<vmem>>, vector<8x1xf32>,
      } else {
      }
      %c0_11 = arith.constant 0 : index
      %c0_12 = arith.constant 0 : index
      %14 = vector.load %arg6[%c0_11, %c0_12] : memref<96x32xbf16, #tpu.memory_space<vmem>>, vector<96x32xbf16>
      %cst = arith.constant dense<0.000000e+00> : vector<96x128xf32>
      %15 = tpu.matmul %14, %7, %cst {dimension_numbers = #tpu.dot_dimension_numbers<[1], [0], [0], [1], [0, 0, 1, 1], [], []>} : vector<96x32xbf16>, vector<32x128xbf16>, vector<96x128xf32> -> vector<96x128xf32>
      %16 = vector.extract_strided_slice %15 {offsets = [0, 0], sizes = [32, 128], strides = [1, 1]} : vector<96x128xf32> to vector<32x128xf32>
      %17 = vector.extract_strided_slice %8 {offsets = [0, 1], sizes = [32, 1], strides = [1, 1]} : vector<32x8xf32> to vector<32x1xf32>
      %18 = vector.broadcast %17 : vector<32x1xf32> to vector<32x128xf32>
      %19 = arith.addf %16, %18 : vector<32x128xf32>
      %20 = vector.extract_strided_slice %15 {offsets = [32, 0], sizes = [32, 128], strides = [1, 1]} : vector<96x128xf32> to vector<32x128xf32>
      %21 = vector.extract_strided_slice %8 {offsets = [0, 2], sizes = [32, 1], strides = [1, 1]} : vector<32x8xf32> to vector<32x1xf32>
      %22 = vector.broadcast %21 : vector<32x1xf32> to vector<32x128xf32>
      %23 = arith.addf %20, %22 : vector<32x128xf32>
      %24 = vector.extract_strided_slice %15 {offsets = [64, 0], sizes = [32, 128], strides = [1, 1]} : vector<96x128xf32> to vector<32x128xf32>
      %25 = arith.truncf %24 : vector<32x128xf32> to vector<32x128xbf16>
      %26 = arith.index_cast %arg2 : i32 to index
      %c0_13 = arith.constant 0 : index
      %c0_14 = arith.constant 0 : index
      %27 = vector.load %arg16[%26, %c0_13, %c0_14] : memref<2x32x128xbf16, #tpu.memory_space<vmem>>, vector<1x32x128xbf16>
      %28 = vector.shape_cast %27 : vector<1x32x128xbf16> to vector<32x128xbf16>
      %29 = vector.shape_cast %25 : vector<32x128xbf16> to vector<1x32x128xbf16>
      tpu.vector_store %arg16[%26, %c0_13, %c0_14], %29 {strides = array<i32>} : memref<2x32x128xbf16, #tpu.memory_space<vmem>>, vector<1x32x128xbf16>,
      %c0_15 = arith.constant 0 : index
      %c0_16 = arith.constant 0 : index
      %30 = vector.load %arg14[%c0_15, %c0_16] : memref<32x8xf32, #tpu.memory_space<vmem>>, vector<32x1xf32>
      %c0_17 = arith.constant 0 : index
      %c0_18 = arith.constant 0 : index
      %31 = vector.load %arg9[%c0_17, %c0_18] : memref<8x32xbf16, #tpu.memory_space<vmem>>, vector<8x32xbf16>
      %32 = vector.broadcast %30 : vector<32x1xf32> to vector<32x128xf32>
      %33 = arith.mulf %19, %32 : vector<32x128xf32>
      %34 = arith.truncf %33 : vector<32x128xf32> to vector<32x128xbf16>
      %cst_19 = arith.constant dense<0.000000e+00> : vector<8x128xf32>
      %35 = tpu.matmul %31, %34, %cst_19 {dimension_numbers = #tpu.dot_dimension_numbers<[1], [0], [0], [1], [0, 0, 1, 1], [], []>} : vector<8x32xbf16>, vector<32x128xbf16>, vector<8x128xf32> -> vector<8x128xf32>
      %c0_20 = arith.constant 0 : index
      %c0_21 = arith.constant 0 : index
      %36 = vector.load %arg15[%c0_20, %c0_21] : memref<8x2xf32, #tpu.memory_space<vmem>>, vector<8x1xf32>
      %c0_22 = arith.constant 0 : index
      %c1 = arith.constant 1 : index
      %37 = vector.load %arg15[%c0_22, %c1] : memref<8x2xf32, #tpu.memory_space<vmem>>, vector<8x1xf32>
      %cst_23 = arith.constant dense<0xFF800000> : vector<8xf32>
      %38 = vector.multi_reduction <maximumf>, %35, %cst_23 [1] : vector<8x128xf32> to vector<8xf32>
      %39 = vector.shape_cast %38 : vector<8xf32> to vector<8x1xf32>
      %40 = arith.maximumf %36, %39 : vector<8x1xf32>
      %41 = arith.subf %36, %40 : vector<8x1xf32>
      %42 = math.exp %41 : vector<8x1xf32>
      %43 = vector.broadcast %40 : vector<8x1xf32> to vector<8x128xf32>
      %44 = arith.subf %35, %43 : vector<8x128xf32>
      %45 = math.exp %44 : vector<8x128xf32>
      %c0_24 = arith.constant 0 : index
      %c0_25 = arith.constant 0 : index
      %46 = vector.load %arg15[%c0_24, %c0_25] : memref<8x2xf32, #tpu.memory_space<vmem>>, vector<8x1xf32>
      tpu.vector_store %arg15[%c0_24, %c0_25], %40 {strides = array<i32>} : memref<8x2xf32, #tpu.memory_space<vmem>>, vector<8x1xf32>,
      %47 = arith.mulf %42, %37 : vector<8x1xf32>
      %cst_26 = arith.constant dense<0.000000e+00> : vector<8xf32>
      %48 = vector.multi_reduction <add>, %45, %cst_26 [1] : vector<8x128xf32> to vector<8xf32>
      %49 = vector.shape_cast %48 : vector<8xf32> to vector<8x1xf32>
      %50 = arith.addf %47, %49 : vector<8x1xf32>
      %c0_27 = arith.constant 0 : index
      %c1_28 = arith.constant 1 : index
      %51 = vector.load %arg15[%c0_27, %c1_28] : memref<8x2xf32, #tpu.memory_space<vmem>>, vector<8x1xf32>
      tpu.vector_store %arg15[%c0_27, %c1_28], %50 {strides = array<i32>} : memref<8x2xf32, #tpu.memory_space<vmem>>, vector<8x1xf32>,
      %c0_29 = arith.constant 0 : index
      %c0_30 = arith.constant 0 : index
      %52 = vector.load %arg10[%c0_29, %c0_30] : memref<32x8xbf16, #tpu.memory_space<vmem>>, vector<32x8xbf16>
      %53 = arith.truncf %45 : vector<8x128xf32> to vector<8x128xbf16>
      %cst_31 = arith.constant dense<0.000000e+00> : vector<32x128xf32>
      %54 = tpu.matmul %52, %53, %cst_31 {dimension_numbers = #tpu.dot_dimension_numbers<[1], [0], [0], [1], [0, 0, 1, 1], [], []>} : vector<32x8xbf16>, vector<8x128xbf16>, vector<32x128xf32> -> vector<32x128xf32>
      %55 = arith.extf %52 : vector<32x8xbf16> to vector<32x8xf32>
      %cst_32 = arith.constant dense<0.000000e+00> : vector<32x1xf32>
      %56 = tpu.matmul %55, %42, %cst_32 {dimension_numbers = #tpu.dot_dimension_numbers<[1], [0], [0], [1], [0, 0, 1, 1], [], []>} : vector<32x8xf32>, vector<8x1xf32>, vector<32x1xf32> -> vector<32x1xf32>
      %c0_33 = arith.constant 0 : index
      %c1_34 = arith.constant 1 : index
      %57 = vector.load %arg14[%c0_33, %c1_34] : memref<32x8xf32, #tpu.memory_space<vmem>>, vector<32x1xf32>
      %58 = arith.mulf %56, %57 : vector<32x1xf32>
      %59 = arith.mulf %23, %54 : vector<32x128xf32>
      %cst_35 = arith.constant dense<0.000000e+00> : vector<32xf32>
      %60 = vector.multi_reduction <add>, %59, %cst_35 [1] : vector<32x128xf32> to vector<32xf32>
      %61 = vector.shape_cast %60 : vector<32xf32> to vector<32x1xf32>
      %62 = arith.addf %58, %61 : vector<32x1xf32>
      %c0_36 = arith.constant 0 : index
      %c1_37 = arith.constant 1 : index
      %63 = vector.load %arg14[%c0_36, %c1_37] : memref<32x8xf32, #tpu.memory_space<vmem>>, vector<32x1xf32>
      tpu.vector_store %arg14[%c0_36, %c1_37], %62 {strides = array<i32>} : memref<32x8xf32, #tpu.memory_space<vmem>>, vector<32x1xf32>,
      %c1_i32_38 = arith.constant 1 : i32
      %64 = arith.cmpi eq, %arg2, %c1_i32_38 : i32
      %65 = arith.extui %64 : i1 to i32
      %c0_i32_39 = arith.constant 0 : i32
      %66 = arith.cmpi ne, %65, %c0_i32_39 : i32
      scf.if %66 {
        %c0_40 = arith.constant 0 : index
        %c0_41 = arith.constant 0 : index
        %67 = vector.load %arg12[%c0_40, %c0_41] : memref<8x32xf32, #tpu.memory_space<vmem>>, vector<8x32xf32>
        %c0_42 = arith.constant 0 : index
        %c1_43 = arith.constant 1 : index
        %68 = vector.load %arg15[%c0_42, %c1_43] : memref<8x2xf32, #tpu.memory_space<vmem>>, vector<8x1xf32>
        %cst_44 = arith.constant 1.000000e+00 : f32
        %69 = vector.broadcast %cst_44 : f32 to vector<8x1xf32>
        %70 = arith.divf %69, %68 : vector<8x1xf32>
        %71 = arith.extf %52 : vector<32x8xbf16> to vector<32x8xf32>
        %cst_45 = arith.constant dense<0.000000e+00> : vector<32x1xf32>
        %72 = tpu.matmul %71, %70, %cst_45 {dimension_numbers = #tpu.dot_dimension_numbers<[1], [0], [0], [1], [0, 0, 1, 1], [], []>} : vector<32x8xf32>, vector<8x1xf32>, vector<32x1xf32> -> vector<32x1xf32>
        %c0_46 = arith.constant 0 : index
        %c1_47 = arith.constant 1 : index
        %73 = vector.load %arg14[%c0_46, %c1_47] : memref<32x8xf32, #tpu.memory_space<vmem>>, vector<32x1xf32>
        %74 = arith.mulf %73, %72 : vector<32x1xf32>
        %c0_48 = arith.constant 0 : index
        %c0_49 = arith.constant 0 : index
        %75 = vector.load %arg7[%c0_48, %c0_49] : memref<32x32xbf16, #tpu.memory_space<vmem>>, vector<32x32xbf16>
        %76 = arith.extf %75 : vector<32x32xbf16> to vector<32x32xf32>
        %77 = vector.broadcast %74 : vector<32x1xf32> to vector<32x32xf32>
        %78 = arith.mulf %76, %77 : vector<32x32xf32>
        %cst_50 = arith.constant dense<0.000000e+00> : vector<32xf32>
        %79 = vector.multi_reduction <add>, %78, %cst_50 [0] : vector<32x32xf32> to vector<32xf32>
        %80 = vector.shape_cast %79 : vector<32xf32> to vector<1x32xf32>
        %81 = vector.extract_strided_slice %67 {offsets = [0, 0], sizes = [1, 32], strides = [1, 1]} : vector<8x32xf32> to vector<1x32xf32>
        %82 = arith.addf %80, %81 : vector<1x32xf32>
        %83 = vector.extract_strided_slice %67 {offsets = [1, 0], sizes = [1, 32], strides = [1, 1]} : vector<8x32xf32> to vector<1x32xf32>
        %84 = arith.mulf %83, %82 : vector<1x32xf32>
        %85 = arith.addf %10, %84 : vector<1x32xf32>
        %c0_51 = arith.constant 0 : index
        %c0_52 = arith.constant 0 : index
        %86 = vector.load %arg8[%c0_51, %c0_52] : memref<32x32xbf16, #tpu.memory_space<vmem>>, vector<32x32xbf16>
        %87 = arith.extf %86 : vector<32x32xbf16> to vector<32x32xf32>
        %88 = vector.broadcast %85 : vector<1x32xf32> to vector<32x32xf32>
        %89 = arith.mulf %87, %88 : vector<32x32xf32>
        %cst_53 = arith.constant dense<0.000000e+00> : vector<32xf32>
        %90 = vector.multi_reduction <add>, %89, %cst_53 [1] : vector<32x32xf32> to vector<32xf32>
        %91 = vector.shape_cast %90 : vector<32xf32> to vector<32x1xf32>
        %92 = vector.extract_strided_slice %8 {offsets = [0, 3], sizes = [32, 1], strides = [1, 1]} : vector<32x8xf32> to vector<32x1xf32>
        %93 = arith.addf %91, %92 : vector<32x1xf32>
        %c0_54 = arith.constant 0 : index
        %c2 = arith.constant 2 : index
        %94 = vector.load %arg14[%c0_54, %c2] : memref<32x8xf32, #tpu.memory_space<vmem>>, vector<32x1xf32>
        tpu.vector_store %arg14[%c0_54, %c2], %93 {strides = array<i32>} : memref<32x8xf32, #tpu.memory_space<vmem>>, vector<32x1xf32>,
      } else {
      }
    } else {
    }
    %c1_i32 = arith.constant 1 : i32
    %3 = arith.cmpi eq, %arg1, %c1_i32 : i32
    %4 = arith.extui %3 : i1 to i32
    %c0_i32_1 = arith.constant 0 : i32
    %5 = arith.cmpi ne, %4, %c0_i32_1 : i32
    scf.if %5 {
      %6 = arith.index_cast %arg2 : i32 to index
      %c0 = arith.constant 0 : index
      %c0_2 = arith.constant 0 : index
      %7 = vector.load %arg16[%6, %c0, %c0_2] : memref<2x32x128xbf16, #tpu.memory_space<vmem>>, vector<1x32x128xbf16>
      %8 = vector.shape_cast %7 : vector<1x32x128xbf16> to vector<32x128xbf16>
      %9 = arith.extf %8 : vector<32x128xbf16> to vector<32x128xf32>
      %c0_3 = arith.constant 0 : index
      %c2 = arith.constant 2 : index
      %10 = vector.load %arg14[%c0_3, %c2] : memref<32x8xf32, #tpu.memory_space<vmem>>, vector<32x1xf32>
      %11 = vector.broadcast %10 : vector<32x1xf32> to vector<32x128xf32>
      %12 = arith.addf %9, %11 : vector<32x128xf32>
      %13 = arith.truncf %12 : vector<32x128xf32> to vector<32x128xbf16>
      %c0_4 = arith.constant 0 : index
      %c0_5 = arith.constant 0 : index
      %c0_6 = arith.constant 0 : index
      %14 = vector.load %arg13[%c0_4, %c0_5, %c0_6] : memref<1x32x128xbf16, #tpu.memory_space<vmem>>, vector<1x32x128xbf16>
      %15 = vector.shape_cast %14 : vector<1x32x128xbf16> to vector<32x128xbf16>
      %16 = vector.shape_cast %13 : vector<32x128xbf16> to vector<1x32x128xbf16>
      tpu.vector_store %arg13[%c0_4, %c0_5, %c0_6], %16 {strides = array<i32>} : memref<1x32x128xbf16, #tpu.memory_space<vmem>>, vector<1x32x128xbf16>,
    } else {
    }
    return
  }
  func.func @transform_0(%arg0: i32, %arg1: i32, %arg2: i32) -> (i32, i32, i32) {
    %c0_i32 = arith.constant 0 : i32
    %c0_i32_0 = arith.constant 0 : i32
    %c0_i32_1 = arith.constant 0 : i32
    return %arg0, %c0_i32, %c0_i32_0 : i32, i32, i32
  }
  func.func @transform_1(%arg0: i32, %arg1: i32, %arg2: i32) -> (i32, i32, i32) {
    %c1_i32 = arith.constant 1 : i32
    %0 = arith.subi %c1_i32, %arg1 : i32
    %1 = arith.muli %arg2, %0 : i32
    %c1_i32_0 = arith.constant 1 : i32
    %2 = arith.muli %c1_i32_0, %arg1 : i32
    %3 = arith.addi %1, %2 : i32
    %c0_i32 = arith.constant 0 : i32
    %c0_i32_1 = arith.constant 0 : i32
    return %arg0, %c0_i32, %3 : i32, i32, i32
  }
  func.func @transform_2(%arg0: i32, %arg1: i32, %arg2: i32) -> (i32, i32) {
    %c0_i32 = arith.constant 0 : i32
    %c0_i32_0 = arith.constant 0 : i32
    %c0_i32_1 = arith.constant 0 : i32
    return %c0_i32, %c0_i32_0 : i32, i32
  }
  func.func @transform_3(%arg0: i32, %arg1: i32, %arg2: i32) -> (i32, i32) {
    %c0_i32 = arith.constant 0 : i32
    %c0_i32_0 = arith.constant 0 : i32
    %c0_i32_1 = arith.constant 0 : i32
    return %c0_i32, %c0_i32_0 : i32, i32
  }
  func.func @transform_4(%arg0: i32, %arg1: i32, %arg2: i32) -> (i32, i32) {
    %c0_i32 = arith.constant 0 : i32
    %c0_i32_0 = arith.constant 0 : i32
    %c0_i32_1 = arith.constant 0 : i32
    return %c0_i32, %c0_i32_0 : i32, i32
  }
  func.func @transform_5(%arg0: i32, %arg1: i32, %arg2: i32) -> (i32, i32) {
    %c0_i32 = arith.constant 0 : i32
    %c0_i32_0 = arith.constant 0 : i32
    %c0_i32_1 = arith.constant 0 : i32
    return %c0_i32, %c0_i32_0 : i32, i32
  }
  func.func @transform_6(%arg0: i32, %arg1: i32, %arg2: i32) -> (i32, i32) {
    %c0_i32 = arith.constant 0 : i32
    %c0_i32_0 = arith.constant 0 : i32
    %c0_i32_1 = arith.constant 0 : i32
    return %c0_i32, %c0_i32_0 : i32, i32
  }
  func.func @transform_7(%arg0: i32, %arg1: i32, %arg2: i32) -> (i32, i32) {
    %c0_i32 = arith.constant 0 : i32
    %c0_i32_0 = arith.constant 0 : i32
    %c0_i32_1 = arith.constant 0 : i32
    return %c0_i32, %c0_i32_0 : i32, i32
  }
  func.func @transform_8(%arg0: i32, %arg1: i32, %arg2: i32) -> (i32, i32) {
    %c0_i32 = arith.constant 0 : i32
    %c0_i32_0 = arith.constant 0 : i32
    %c0_i32_1 = arith.constant 0 : i32
    return %c0_i32, %c0_i32_0 : i32, i32
  }
  func.func @transform_9(%arg0: i32, %arg1: i32, %arg2: i32) -> (i32, i32) {
    %c0_i32 = arith.constant 0 : i32
    %c0_i32_0 = arith.constant 0 : i32
    %c0_i32_1 = arith.constant 0 : i32
    return %c0_i32, %c0_i32_0 : i32, i32
  }
  func.func @transform_10(%arg0: i32, %arg1: i32, %arg2: i32) -> (i32, i32, i32) {
    %0 = arith.muli %arg1, %arg2 : i32
    %c0_i32 = arith.constant 0 : i32
    %c0_i32_0 = arith.constant 0 : i32
    return %arg0, %c0_i32, %0 : i32, i32, i32
  }
}

</mosaic_0001>

<llo_original>
// kernel: tpu_custom_call.1
$region0: #{tpu_custom_call.1}
  #allocation0 [shape = 'u32[]', space=smem, size = 0x4, offset = 0x4, fixed_abs, tag = 'smem constant byte address 0x4 - core index']
  #allocation1 [shape = 'u32[144,128]{1,0:T(1,128)}', space=vmem, size = 0x12000, scoped, tag = 'internal scratch']
  #allocation2 [shape = 'f32[32,8]{1,0:T(8,128)}', space=vmem, size = 0x4000, scoped, tag = 'scratch operand']
  #allocation3 [shape = 'f32[8,2]{1,0:T(8,128)}', space=vmem, size = 0x1000, scoped, tag = 'scratch operand']
  #allocation4 [shape = 'bf16[2,32,128]{2,1,0:T(16,128)(2,1)}', space=vmem, size = 0x4000, scoped, tag = 'scratch operand']
  %s0 = inlined_call_operand.vmem [shape: f32[2,1,32], index: 0, kind: input, shape index: {}]
  %s1 = inlined_call_operand.vmem [shape: bf16[2,32,256], index: 1, kind: input, shape index: {}]
  %s2 = inlined_call_operand.vmem [shape: bf16[32,32], index: 2, kind: input, shape index: {}]
  %s3 = inlined_call_operand.vmem [shape: bf16[96,32], index: 3, kind: input, shape index: {}]
  %s4 = inlined_call_operand.vmem [shape: bf16[32,32], index: 4, kind: input, shape index: {}]
  %s5 = inlined_call_operand.vmem [shape: bf16[32,32], index: 5, kind: input, shape index: {}]
  %s6 = inlined_call_operand.hbm [shape: bf16[8,32], index: 6, kind: input, shape index: {}]
  %s7 = inlined_call_operand.vmem [shape: bf16[32,8], index: 7, kind: input, shape index: {}]
  %s8 = inlined_call_operand.vmem [shape: f32[32,8], index: 8, kind: input, shape index: {}]
  %s9 = inlined_call_operand.vmem [shape: f32[8,32], index: 9, kind: input, shape index: {}]
  %s10 = inlined_call_operand.hbm [shape: bf16[2,32,256], index: 10, kind: output, shape index: {}]
  %s11 = sld [smem:[#allocation0]]
  $region134: #{tpu_custom_call.1} parent=0
    _
  %s13 = ssub.s32 1, %s11
  %s14 = scalar_select 0, %s13, %s11
  $region1: #{tpu_custom_call.1} parent=0
    #allocation5 [shape = 'u8[16384]{0}', space=vmem, size = 0x4000, scoped, tag = 'input window, operand 1']
    #allocation6 [shape = 'u8[2048]{0}', space=vmem, size = 0x800, scoped, tag = 'input window, operand 6, single buffered']
    #allocation7 [shape = 's32[2]{0}', space=sflag, size = 0x8, scoped, tag = 'scoped memory for tpu_custom_call.1']
    #allocation8 [shape = 's32[2]{0}', space=sflag, size = 0x8, scoped, tag = 'scoped memory for tpu_custom_call.1']
    #allocation9 [shape = 'u8[16384]{0}', space=vmem, size = 0x4000, scoped, tag = 'output window, operand 0']
    %15 = vsyncpa [#allocation7], 0
    %16 = vsyncpa [#allocation8], 0
    %s17 = scalar_lea.sflag [#allocation8], 1
    %18 = vsyncpa %s17, 0
    loop: start=0, step=1, limit=10
    $region2: #{tpu_custom_call.1} parent=1 // loop_pre_header
      _
    $region3: #{tpu_custom_call.1} parent=1 // loop_header
      %s20 = sphi 0, %s24
      %p21 = scmp.ge.s32.totalorder %s20, 10
      %s27 = sphi 0, %s46
      %s28 = sphi 0, %s42
      %s29 = sphi 0, %s38
      %s30 = sphi 0, %s27
      %s31 = sphi 0, %s28
      %s32 = sphi 0, %s29
      %s33 = sphi 0, %s30
      %s34 = sphi 0, %s31
      %s35 = sphi 0, %s32
      %s49 = sphi 0, %s51
      %s52 = sphi 0, %s49
      %s53 = sphi 0, %s52
      %s69 = sphi 0, %s53
      %s83 = sphi 0, %s85
      %s86 = sphi 0, %s83
      %s87 = sphi 0, %s86
      %s103 = sphi 0, %s87
      %s107 = sphi 0, %s107
      %s109 = sphi 0, %s107
      %s110 = sphi 0, %s109
      %s124 = sphi 0, %s110
      %s128 = sphi 0, %s128
      %s130 = sphi 0, %s128
      %s131 = sphi 0, %s130
      %s145 = sphi 0, %s131
      %s149 = sphi 0, %s149
      %s151 = sphi 0, %s149
      %s152 = sphi 0, %s151
      %s166 = sphi 0, %s152
      %s170 = sphi 0, %s170
      %s172 = sphi 0, %s170
      %s173 = sphi 0, %s172
      %s187 = sphi 0, %s173
      %s191 = sphi 0, %s191
      %s193 = sphi 0, %s191
      %s194 = sphi 0, %s193
      %s208 = sphi 0, %s194
      %s212 = sphi 0, %s212
      %s214 = sphi 0, %s212
      %s215 = sphi 0, %s214
      %s229 = sphi 0, %s215
      %s233 = sphi 0, %s233
      %s235 = sphi 0, %s233
      %s236 = sphi 0, %s235
      %s250 = sphi 0, %s236
      %s254 = sphi 0, %s254
      %s256 = sphi 0, %s254
      %s257 = sphi 0, %s256
      %s271 = sphi 0, %s257
      %s281 = sphi 0, %s283
      %s284 = sphi 0, %s281
      %s285 = sphi 0, %s284
      %s301 = sphi 0, %s285
    $region4: #{tpu_custom_call.1} parent=1 // loop_header_branch
      %23 = sbr.rel (%p21) target = $region8
    $region5: #{tpu_custom_call.1} parent=1 // loop_body
      %s25 = ssub.s32 %s20, 1
      %s26 = ssub.s32 %s20, 2
      %s36 = sadd.s32 1, %s29
      %p37 = scmp.ge.s32.totalorder %s36, 2
      %s38 = scalar_select %p37, 0, %s36
      %s39 = sadd.s32 1, %s28
      %s40 = scalar_select %p37, %s39, %s28
      %p41 = scmp.ge.s32.totalorder %s40, 2
      %s42 = scalar_select %p41, 0, %s40
      %s43 = sadd.s32 1, %s27
      %s44 = scalar_select %p41, %s43, %s27
      %p45 = scmp.ge.s32.totalorder %s44, 2
      %s46 = scalar_select %p45, 0, %s44
      %s47 = ssub.s32 %s27, %s46
      %p48 = scmp.eq.s32.totalorder %s47, 0
      %s50 = sadd.s32 %s49, 1
      %s51 = scalar_select %p48, %s49, %s50
      %p54 = pneg %p48
      %p55 = scmp.eq.s32.totalorder %s20, 7
      %p56 = por %p54, %p55
      %p57 = scmp.ne.s32.totalorder %s49, %s52
      %p58 = scmp.eq.s32.totalorder %s20, 0
      %p59 = por %p57, %p58
      %p60 = scmp.ne.s32.totalorder %s49, %s52
      %p61 = scmp.eq.s32.totalorder %s25, 7
      %p62 = por %p60, %p61
      %p63 = scmp.ne.s32.totalorder %s52, %s53
      %p64 = scmp.eq.s32.totalorder %s25, 0
      %p65 = por %p63, %p64
      %p66 = scmp.ne.s32.totalorder %s52, %s53
      %p67 = scmp.eq.s32.totalorder %s26, 7
      %p68 = por %p66, %p67
      %p70 = scmp.ne.s32.totalorder %s53, %s69
      %p71 = scmp.eq.s32.totalorder %s26, 0
      %p72 = por %p70, %p71
      %s73 = ssub.s32 1, %s28
      %s74 = smul.u32 %s29, %s73
      %s75 = sadd.s32 %s74, %s28
      %s76 = ssub.s32 1, %s42
      %s77 = smul.u32 %s38, %s76
      %s78 = sadd.s32 %s77, %s42
      %s79 = ssub.s32 %s27, %s46
      %s80 = ssub.s32 %s75, %s78
      %s81 = sor.u32 %s79, %s80
      %p82 = scmp.eq.s32.totalorder %s81, 0
      %s84 = sadd.s32 %s83, 1
      %s85 = scalar_select %p82, %s83, %s84
      %p88 = pneg %p82
      %p89 = scmp.eq.s32.totalorder %s20, 7
      %p90 = por %p88, %p89
      %p91 = scmp.ne.s32.totalorder %s83, %s86
      %p92 = scmp.eq.s32.totalorder %s20, 0
      %p93 = por %p91, %p92
      %p94 = scmp.ne.s32.totalorder %s83, %s86
      %p95 = scmp.eq.s32.totalorder %s25, 7
      %p96 = por %p94, %p95
      %p97 = scmp.ne.s32.totalorder %s86, %s87
      %p98 = scmp.eq.s32.totalorder %s25, 0
      %p99 = por %p97, %p98
      %p100 = scmp.ne.s32.totalorder %s86, %s87
      %p101 = scmp.eq.s32.totalorder %s26, 7
      %p102 = por %p100, %p101
      %p104 = scmp.ne.s32.totalorder %s87, %s103
      %p105 = scmp.eq.s32.totalorder %s26, 0
      %p106 = por %p104, %p105
      %s108 = sadd.s32 %s107, 1
      %p111 = scmp.eq.s32.totalorder %s20, 7
      %p112 = scmp.ne.s32.totalorder %s107, %s109
      %p113 = scmp.eq.s32.totalorder %s20, 0
      %p114 = por %p112, %p113
      %p115 = scmp.ne.s32.totalorder %s107, %s109
      %p116 = scmp.eq.s32.totalorder %s25, 7
      %p117 = por %p115, %p116
      %p118 = scmp.ne.s32.totalorder %s109, %s110
      %p119 = scmp.eq.s32.totalorder %s25, 0
      %p120 = por %p118, %p119
      %p121 = scmp.ne.s32.totalorder %s109, %s110
      %p122 = scmp.eq.s32.totalorder %s26, 7
      %p123 = por %p121, %p122
      %p125 = scmp.ne.s32.totalorder %s110, %s124
      %p126 = scmp.eq.s32.totalorder %s26, 0
      %p127 = por %p125, %p126
      %s129 = sadd.s32 %s128, 1
      %p132 = scmp.eq.s32.totalorder %s20, 7
      %p133 = scmp.ne.s32.totalorder %s128, %s130
      %p134 = scmp.eq.s32.totalorder %s20, 0
      %p135 = por %p133, %p134
      %p136 = scmp.ne.s32.totalorder %s128, %s130
      %p137 = scmp.eq.s32.totalorder %s25, 7
      %p138 = por %p136, %p137
      %p139 = scmp.ne.s32.totalorder %s130, %s131
      %p140 = scmp.eq.s32.totalorder %s25, 0
      %p141 = por %p139, %p140
      %p142 = scmp.ne.s32.totalorder %s130, %s131
      %p143 = scmp.eq.s32.totalorder %s26, 7
      %p144 = por %p142, %p143
      %p146 = scmp.ne.s32.totalorder %s131, %s145
      %p147 = scmp.eq.s32.totalorder %s26, 0
      %p148 = por %p146, %p147
      %s150 = sadd.s32 %s149, 1
      %p153 = scmp.eq.s32.totalorder %s20, 7
      %p154 = scmp.ne.s32.totalorder %s149, %s151
      %p155 = scmp.eq.s32.totalorder %s20, 0
      %p156 = por %p154, %p155
      %p157 = scmp.ne.s32.totalorder %s149, %s151
      %p158 = scmp.eq.s32.totalorder %s25, 7
      %p159 = por %p157, %p158
      %p160 = scmp.ne.s32.totalorder %s151, %s152
      %p161 = scmp.eq.s32.totalorder %s25, 0
      %p162 = por %p160, %p161
      %p163 = scmp.ne.s32.totalorder %s151, %s152
      %p164 = scmp.eq.s32.totalorder %s26, 7
      %p165 = por %p163, %p164
      %p167 = scmp.ne.s32.totalorder %s152, %s166
      %p168 = scmp.eq.s32.totalorder %s26, 0
      %p169 = por %p167, %p168
      %s171 = sadd.s32 %s170, 1
      %p174 = scmp.eq.s32.totalorder %s20, 7
      %p175 = scmp.ne.s32.totalorder %s170, %s172
      %p176 = scmp.eq.s32.totalorder %s20, 0
      %p177 = por %p175, %p176
      %p178 = scmp.ne.s32.totalorder %s170, %s172
      %p179 = scmp.eq.s32.totalorder %s25, 7
      %p180 = por %p178, %p179
      %p181 = scmp.ne.s32.totalorder %s172, %s173
      %p182 = scmp.eq.s32.totalorder %s25, 0
      %p183 = por %p181, %p182
      %p184 = scmp.ne.s32.totalorder %s172, %s173
      %p185 = scmp.eq.s32.totalorder %s26, 7
      %p186 = por %p184, %p185
      %p188 = scmp.ne.s32.totalorder %s173, %s187
      %p189 = scmp.eq.s32.totalorder %s26, 0
      %p190 = por %p188, %p189
      %s192 = sadd.s32 %s191, 1
      %p195 = scmp.eq.s32.totalorder %s20, 7
      %p196 = scmp.ne.s32.totalorder %s191, %s193
      %p197 = scmp.eq.s32.totalorder %s20, 0
      %p198 = por %p196, %p197
      %p199 = scmp.ne.s32.totalorder %s191, %s193
      %p200 = scmp.eq.s32.totalorder %s25, 7
      %p201 = por %p199, %p200
      %p202 = scmp.ne.s32.totalorder %s193, %s194
      %p203 = scmp.eq.s32.totalorder %s25, 0
      %p204 = por %p202, %p203
      %p205 = scmp.ne.s32.totalorder %s193, %s194
      %p206 = scmp.eq.s32.totalorder %s26, 7
      %p207 = por %p205, %p206
      %p209 = scmp.ne.s32.totalorder %s194, %s208
      %p210 = scmp.eq.s32.totalorder %s26, 0
      %p211 = por %p209, %p210
      %s213 = sadd.s32 %s212, 1
      %p216 = scmp.eq.s32.totalorder %s20, 7
      %p217 = scmp.ne.s32.totalorder %s212, %s214
      %p218 = scmp.eq.s32.totalorder %s20, 0
      %p219 = por %p217, %p218
      %p220 = scmp.ne.s32.totalorder %s212, %s214
      %p221 = scmp.eq.s32.totalorder %s25, 7
      %p222 = por %p220, %p221
      %p223 = scmp.ne.s32.totalorder %s214, %s215
      %p224 = scmp.eq.s32.totalorder %s25, 0
      %p225 = por %p223, %p224
      %p226 = scmp.ne.s32.totalorder %s214, %s215
      %p227 = scmp.eq.s32.totalorder %s26, 7
      %p228 = por %p226, %p227
      %p230 = scmp.ne.s32.totalorder %s215, %s229
      %p231 = scmp.eq.s32.totalorder %s26, 0
      %p232 = por %p230, %p231
      %s234 = sadd.s32 %s233, 1
      %p237 = scmp.eq.s32.totalorder %s20, 7
      %p238 = scmp.ne.s32.totalorder %s233, %s235
      %p239 = scmp.eq.s32.totalorder %s20, 0
      %p240 = por %p238, %p239
      %p241 = scmp.ne.s32.totalorder %s233, %s235
      %p242 = scmp.eq.s32.totalorder %s25, 7
      %p243 = por %p241, %p242
      %p244 = scmp.ne.s32.totalorder %s235, %s236
      %p245 = scmp.eq.s32.totalorder %s25, 0
      %p246 = por %p244, %p245
      %p247 = scmp.ne.s32.totalorder %s235, %s236
      %p248 = scmp.eq.s32.totalorder %s26, 7
      %p249 = por %p247, %p248
      %p251 = scmp.ne.s32.totalorder %s236, %s250
      %p252 = scmp.eq.s32.totalorder %s26, 0
      %p253 = por %p251, %p252
      %s255 = sadd.s32 %s254, 1
      %p258 = scmp.eq.s32.totalorder %s20, 7
      %p259 = scmp.ne.s32.totalorder %s254, %s256
      %p260 = scmp.eq.s32.totalorder %s20, 0
      %p261 = por %p259, %p260
      %p262 = scmp.ne.s32.totalorder %s254, %s256
      %p263 = scmp.eq.s32.totalorder %s25, 7
      %p264 = por %p262, %p263
      %p265 = scmp.ne.s32.totalorder %s256, %s257
      %p266 = scmp.eq.s32.totalorder %s25, 0
      %p267 = por %p265, %p266
      %p268 = scmp.ne.s32.totalorder %s256, %s257
      %p269 = scmp.eq.s32.totalorder %s26, 7
      %p270 = por %p268, %p269
      %p272 = scmp.ne.s32.totalorder %s257, %s271
      %p273 = scmp.eq.s32.totalorder %s26, 0
      %p274 = por %p272, %p273
      %s275 = smul.u32 %s28, %s29
      %s276 = smul.u32 %s42, %s38
      %s277 = ssub.s32 %s27, %s46
      %s278 = ssub.s32 %s275, %s276
      %s279 = sor.u32 %s277, %s278
      %p280 = scmp.eq.s32.totalorder %s279, 0
      %s282 = sadd.s32 %s281, 1
      %s283 = scalar_select %p280, %s281, %s282
      %p286 = pneg %p280
      %p287 = scmp.eq.s32.totalorder %s20, 7
      %p288 = por %p286, %p287
      %p289 = scmp.ne.s32.totalorder %s281, %s284
      %p290 = scmp.eq.s32.totalorder %s20, 0
      %p291 = por %p289, %p290
      %p292 = scmp.ne.s32.totalorder %s281, %s284
      %p293 = scmp.eq.s32.totalorder %s25, 7
      %p294 = por %p292, %p293
      %p295 = scmp.ne.s32.totalorder %s284, %s285
      %p296 = scmp.eq.s32.totalorder %s25, 0
      %p297 = por %p295, %p296
      %p298 = scmp.ne.s32.totalorder %s284, %s285
      %p299 = scmp.eq.s32.totalorder %s26, 7
      %p300 = por %p298, %p299
      %p302 = scmp.ne.s32.totalorder %s285, %s301
      %p303 = scmp.eq.s32.totalorder %s26, 0
      %p304 = por %p302, %p303
      %p305 = scmp.le.s32.totalorder 1, %s20
      %p306 = scmp.lt.s32.totalorder %s20, 9
      %p307 = pnand %p305, %p306
      %p308 = pneg %p307
      // Predicated region
      $region9: #{tpu_custom_call.1} parent=5 // pred_check
        _
      $region10: #{tpu_custom_call.1} parent=5 // pred_check_branch
        %310 = sbr.rel (%p307) target = $region12
      $region11: #{tpu_custom_call.1} parent=5 // pred_region
        %s311 = ssub.s32 %s20, 1
        // Predicated region
        $region13: #{tpu_custom_call.1} parent=11 // pred_check
          %p312 = pneg %p120
        $region14: #{tpu_custom_call.1} parent=11 // pred_check_branch
          %314 = sbr.rel (%p312) target = $region16
        $region15: #{tpu_custom_call.1} parent=11 // pred_region
          _
        $region16: #{tpu_custom_call.1} parent=11 // pred_fallthru
          _
        // Predicated region
        $region17: #{tpu_custom_call.1} parent=11 // pred_check
          %p315 = pneg %p141
        $region18: #{tpu_custom_call.1} parent=11 // pred_check_branch
          %317 = sbr.rel (%p315) target = $region20
        $region19: #{tpu_custom_call.1} parent=11 // pred_region
          _
        $region20: #{tpu_custom_call.1} parent=11 // pred_fallthru
          _
        // Predicated region
        $region21: #{tpu_custom_call.1} parent=11 // pred_check
          %p318 = pneg %p162
        $region22: #{tpu_custom_call.1} parent=11 // pred_check_branch
          %320 = sbr.rel (%p318) target = $region24
        $region23: #{tpu_custom_call.1} parent=11 // pred_region
          _
        $region24: #{tpu_custom_call.1} parent=11 // pred_fallthru
          _
        // Predicated region
        $region25: #{tpu_custom_call.1} parent=11 // pred_check
          %p321 = pneg %p183
        $region26: #{tpu_custom_call.1} parent=11 // pred_check_branch
          %323 = sbr.rel (%p321) target = $region28
        $region27: #{tpu_custom_call.1} parent=11 // pred_region
          _
        $region28: #{tpu_custom_call.1} parent=11 // pred_fallthru
          _
        // Predicated region
        $region29: #{tpu_custom_call.1} parent=11 // pred_check
          %p324 = pneg %p204
        $region30: #{tpu_custom_call.1} parent=11 // pred_check_branch
          %326 = sbr.rel (%p324) target = $region32
        $region31: #{tpu_custom_call.1} parent=11 // pred_region
          %s328 = ssub.s32 64, 64
          %329 = vsyncadd [#allocation7], %s328
          %s331 = sshll.u32 [#allocation6], 4
          %s332 = int_to_ptr.vmem [resolvable:$true] %s331
          %334 = dma.hbm_to_vmem [thread:$0]  %s6, 64, %s332, [#allocation7]
        $region32: #{tpu_custom_call.1} parent=11 // pred_fallthru
          _
        // Predicated region
        $region33: #{tpu_custom_call.1} parent=11 // pred_check
          %p335 = pneg %p225
        $region34: #{tpu_custom_call.1} parent=11 // pred_check_branch
          %337 = sbr.rel (%p335) target = $region36
        $region35: #{tpu_custom_call.1} parent=11 // pred_region
          _
        $region36: #{tpu_custom_call.1} parent=11 // pred_fallthru
          _
        // Predicated region
        $region37: #{tpu_custom_call.1} parent=11 // pred_check
          %p338 = pneg %p246
        $region38: #{tpu_custom_call.1} parent=11 // pred_check_branch
          %340 = sbr.rel (%p338) target = $region40
        $region39: #{tpu_custom_call.1} parent=11 // pred_region
          _
        $region40: #{tpu_custom_call.1} parent=11 // pred_fallthru
          _
        // Predicated region
        $region41: #{tpu_custom_call.1} parent=11 // pred_check
          %p341 = pneg %p267
        $region42: #{tpu_custom_call.1} parent=11 // pred_check_branch
          %343 = sbr.rel (%p341) target = $region44
        $region43: #{tpu_custom_call.1} parent=11 // pred_region
          _
        $region44: #{tpu_custom_call.1} parent=11 // pred_fallthru
          _
      $region12: #{tpu_custom_call.1} parent=5 // pred_fallthru
        _
      %p344 = scmp.lt.s32.totalorder %s20, 8
      // Predicated region
      $region45: #{tpu_custom_call.1} parent=5 // pred_check
        %p345 = pneg %p344
      $region46: #{tpu_custom_call.1} parent=5 // pred_check_branch
        %347 = sbr.rel (%p345) target = $region48
      $region47: #{tpu_custom_call.1} parent=5 // pred_region
        // Predicated region
        $region49: #{tpu_custom_call.1} parent=47 // pred_check
          %p348 = pneg %p59
        $region50: #{tpu_custom_call.1} parent=47 // pred_check_branch
          %350 = sbr.rel (%p348) target = $region52
        $region51: #{tpu_custom_call.1} parent=47 // pred_region
          %p351 = scmp.lt.s32.totalorder %s27, 1
          %s352 = scalar_select %p351, %s27, 1
          %s353 = scalar_lea.vmem %s0, %s352
        $region52: #{tpu_custom_call.1} parent=47 // pred_fallthru
          _
        // Predicated region
        $region53: #{tpu_custom_call.1} parent=47 // pred_check
          %p354 = pneg %p93
        $region54: #{tpu_custom_call.1} parent=47 // pred_check_branch
          %356 = sbr.rel (%p354) target = $region56
        $region55: #{tpu_custom_call.1} parent=47 // pred_region
          %s357 = sand.u32 %s83, 1
          %s358 = sand.u32 %s83, 1
          %s359 = smul.addr %s358, 16
          %s360 = scalar_lea.vmem [#allocation5], %s359
          %s361 = ssub.s32 1, %s28
          %s362 = smul.u32 %s29, %s361
          %s363 = sadd.s32 %s362, %s28
          %s364 = smul.addr %s27, 8
          %s365 = sadd.s32 %s363, %s364
          %s366 = smul.addr %s365, 4
          %s367 = scalar_lea.vmem %s1, %s366
          // Predicated region
          $region57: #{tpu_custom_call.1} parent=55 // pred_check
            _
          $region58: #{tpu_custom_call.1} parent=55 // pred_check_branch
            %369 = sbr.rel (0) target = $region60
          $region59: #{tpu_custom_call.1} parent=55 // pred_region
            // Predicated region
            $region61: #{tpu_custom_call.1} parent=59 // pred_check
              _
            $region62: #{tpu_custom_call.1} parent=59 // pred_check_branch
              %371 = sbr.rel target = $region64
            $region63: #{tpu_custom_call.1} parent=59 // pred_region
              // Predicated region
              $region76: #{tpu_custom_call.1} parent=63 // pred_check
                _
              $region77: #{tpu_custom_call.1} parent=63 // pred_check_branch
                %392 = sbr.rel (0) target = $region79
              $region78: #{tpu_custom_call.1} parent=63 // pred_region
                loop: start=0, step=1, limit=1
                $region80: #{tpu_custom_call.1} parent=78 // loop_pre_header
                  _
                $region81: #{tpu_custom_call.1} parent=78 // loop_header
                  %s394 = sphi 0, %s398
                  %p395 = scmp.ge.s32.totalorder %s394, 1
                  %s399 = sphi %s367, %s367
                  %s400 = sphi %s360, %s360
                $region82: #{tpu_custom_call.1} parent=78 // loop_header_branch
                  %397 = sbr.rel (%p395) target = $region86
                $region83: #{tpu_custom_call.1} parent=78 // loop_body
                  _
                $region84: #{tpu_custom_call.1} parent=78 // loop_footer
                  %s398 = sadd.s32 1, %s394
                $region85: #{tpu_custom_call.1} parent=78 // loop_footer_branch
                  %393 = sbr.rel target = $region81
                $region86: #{tpu_custom_call.1} parent=78 // loop_exit
                  _
                loop: start=0, step=1, limit=1
                $region87: #{tpu_custom_call.1} parent=78 // loop_pre_header
                  _
                $region88: #{tpu_custom_call.1} parent=78 // loop_header
                  %s403 = sphi 0, %s407
                  %p404 = scmp.ge.s32.totalorder %s403, 1
                  %s408 = sphi %s367, %s367
                  %s409 = sphi %s360, %s360
                $region89: #{tpu_custom_call.1} parent=78 // loop_header_branch
                  %406 = sbr.rel (%p404) target = $region93
                $region90: #{tpu_custom_call.1} parent=78 // loop_body
                  %v410 = vld [vmem:[%s408] sm:$0xf]
                  %411 = vst [vmem:[%s409] sm:$0xf] %v410
                  %v412 = vld [vmem:[%s408 + $0x8] sm:$0xf]
                  %413 = vst [vmem:[%s409 + $0x4] sm:$0xf] %v412
                  %v414 = vld [vmem:[%s408 + $0x10] sm:$0xf]
                  %415 = vst [vmem:[%s409 + $0x8] sm:$0xf] %v414
                  %v416 = vld [vmem:[%s408 + $0x18] sm:$0xf]
                  %417 = vst [vmem:[%s409 + $0xc] sm:$0xf] %v416
                $region91: #{tpu_custom_call.1} parent=78 // loop_footer
                  %s407 = sadd.s32 1, %s403
                $region92: #{tpu_custom_call.1} parent=78 // loop_footer_branch
                  %402 = sbr.rel target = $region88
                $region93: #{tpu_custom_call.1} parent=78 // loop_exit
                  _
              $region79: #{tpu_custom_call.1} parent=63 // pred_fallthru
                _
            $region64: #{tpu_custom_call.1} parent=59 // pred_fallthru
              _
            // Predicated region
            $region65: #{tpu_custom_call.1} parent=59 // pred_check
              _
            $region66: #{tpu_custom_call.1} parent=59 // pred_check_branch
              %373 = sbr.rel (0) target = $region68
            $region67: #{tpu_custom_call.1} parent=59 // pred_region
              loop: start=0, step=1, limit=1
              $region69: #{tpu_custom_call.1} parent=67 // loop_pre_header
                _
              $region70: #{tpu_custom_call.1} parent=67 // loop_header
                %s376 = sphi 0, %s380
                %p377 = scmp.ge.s32.totalorder %s376, 1
                %s381 = sphi %s367, %s367
                %s382 = sphi %s360, %s360
              $region71: #{tpu_custom_call.1} parent=67 // loop_header_branch
                %379 = sbr.rel (%p377) target = $region75
              $region72: #{tpu_custom_call.1} parent=67 // loop_body
                %v383 = vld [vmem:[%s381] sm:$0xf]
                %384 = vst [vmem:[%s382] sm:$0xf] %v383
                %v385 = vld [vmem:[%s381 + $0x8] sm:$0xf]
                %386 = vst [vmem:[%s382 + $0x4] sm:$0xf] %v385
                %v387 = vld [vmem:[%s381 + $0x10] sm:$0xf]
                %388 = vst [vmem:[%s382 + $0x8] sm:$0xf] %v387
                %v389 = vld [vmem:[%s381 + $0x18] sm:$0xf]
                %390 = vst [vmem:[%s382 + $0xc] sm:$0xf] %v389
              $region73: #{tpu_custom_call.1} parent=67 // loop_footer
                %s380 = sadd.s32 1, %s376
              $region74: #{tpu_custom_call.1} parent=67 // loop_footer_branch
                %375 = sbr.rel target = $region70
              $region75: #{tpu_custom_call.1} parent=67 // loop_exit
                _
            $region68: #{tpu_custom_call.1} parent=59 // pred_fallthru
              _
          $region60: #{tpu_custom_call.1} parent=55 // pred_fallthru
            _
          %418 = vnop
        $region56: #{tpu_custom_call.1} parent=47 // pred_fallthru
          _
      $region48: #{tpu_custom_call.1} parent=5 // pred_fallthru
        _
      %p419 = scmp.le.s32.totalorder 1, %s20
      %p420 = scmp.lt.s32.totalorder %s20, 9
      %p421 = pnand %p419, %p420
      %p422 = pneg %p421
      // Predicated region
      $region94: #{tpu_custom_call.1} parent=5 // pred_check
        _
      $region95: #{tpu_custom_call.1} parent=5 // pred_check_branch
        %424 = sbr.rel (%p421) target = $region97
      $region96: #{tpu_custom_call.1} parent=5 // pred_region
        %s425 = ssub.s32 %s20, 1
        %s426 = sand.u32 %s86, 1
        %s427 = sand.u32 %s86, 1
        %s428 = smul.addr %s427, 16
        %s429 = scalar_lea.vmem [#allocation5], %s428
        // Predicated region
        $region98: #{tpu_custom_call.1} parent=96 // pred_check
          %p430 = pneg %p99
        $region99: #{tpu_custom_call.1} parent=96 // pred_check_branch
          %432 = sbr.rel (%p430) target = $region101
        $region100: #{tpu_custom_call.1} parent=96 // pred_region
          _
        $region101: #{tpu_custom_call.1} parent=96 // pred_fallthru
          _
        // Predicated region
        $region102: #{tpu_custom_call.1} parent=96 // pred_check
          %p433 = pneg %p204
        $region103: #{tpu_custom_call.1} parent=96 // pred_check_branch
          %435 = sbr.rel (%p433) target = $region105
        $region104: #{tpu_custom_call.1} parent=96 // pred_region
          %436 = dma.done [#allocation7], 64
        $region105: #{tpu_custom_call.1} parent=96 // pred_fallthru
          _
        %p437 = scmp.lt.s32.totalorder %s30, 1
        %s438 = scalar_select %p437, %s30, 1
        %s439 = scalar_lea.vmem %s0, %s438
        %p440 = pneg %p65
        %p441 = pneg %p62
        %s442 = sand.u32 %s86, 1
        %s443 = sand.u32 %s86, 1
        %s444 = smul.addr %s443, 16
        %s445 = scalar_lea.vmem [#allocation5], %s444
        %p446 = pneg %p99
        %p447 = pneg %p96
        %p448 = pneg %p120
        %p449 = pneg %p117
        %p450 = pneg %p141
        %p451 = pneg %p138
        %p452 = pneg %p162
        %p453 = pneg %p159
        %p454 = pneg %p183
        %p455 = pneg %p180
        %p456 = pneg %p204
        %p457 = pneg %p201
        %p458 = pneg %p225
        %p459 = pneg %p222
        %p460 = pneg %p246
        %p461 = pneg %p243
        %p462 = pneg %p267
        %p463 = pneg %p264
        %p464 = pneg %p297
        %p465 = pneg %p294
        %s466 = sand.u32 %s284, 1
        %s467 = scalar_lea.sflag [#allocation8], %s466
        %s468 = sand.u32 %s284, 1
        %s469 = smul.addr %s468, 16
        %s470 = scalar_lea.vmem [#allocation9], %s469
        %p471 = scmp.lt.s32.totalorder %s30, 1
        %s472 = scalar_select %p471, %s30, 1
        %s473 = scalar_lea.vmem %s0, %s472
        %s474 = ssub.s32 1, %s31
        %s475 = smul.u32 %s32, %s474
        %s476 = sadd.s32 %s475, %s31
        %s477 = smul.u32 %s31, %s32
        %p479 = scmp.eq.s32.totalorder %s31, 0
        // Predicated region
        $region106: #{tpu_custom_call.1} parent=96 // pred_check
          %p480 = pneg %p479
        $region107: #{tpu_custom_call.1} parent=96 // pred_check_branch
          %482 = sbr.rel (%p480) target = $region109
        $region108: #{tpu_custom_call.1} parent=96 // pred_region
          %v483 = vld [vmem:[%s429] sm:$0xf]
          %v484 = vld [vmem:[%s429 + $0x4] sm:$0xf]
          %v485 = vld [vmem:[%s429 + $0x8] sm:$0xf]
          %v486 = vld [vmem:[%s429 + $0xc] sm:$0xf]
          %v487 = vld [vmem:[%s8] sm:$0xff]
          %v488 = vld [vmem:[%s8 + $0x8] sm:$0xff]
          %v489 = vld [vmem:[%s8 + $0x10] sm:$0xff]
          %v490 = vld [vmem:[%s8 + $0x18] sm:$0xff]
          %v491 = vld [vmem:[%s473] sm:$0x1]
          %p492 = scmp.eq.s32.totalorder %s32, 0
          // Predicated region
          $region110: #{tpu_custom_call.1} parent=108 // pred_check
            %p493 = pneg %p492
          $region111: #{tpu_custom_call.1} parent=108 // pred_check_branch
            %495 = sbr.rel (%p493) target = $region113
          $region112: #{tpu_custom_call.1} parent=108 // pred_region
            %v496 = vld [vmem:[%s2] sm:$0xf]
            %v497 = vld [vmem:[%s2 + $0x4] sm:$0xf]
            %v498 = vld [vmem:[%s2 + $0x8] sm:$0xf]
            %v499 = vld [vmem:[%s2 + $0xc] sm:$0xf]
            %v500 = vunpack.c.l.bf16 %v496
            %v501 = vunpack.c.l.bf16 %v497
            %v502 = vunpack.c.l.bf16 %v498
            %v503 = vunpack.c.l.bf16 %v499
            %v505 = vlaneseq
            %v506 = vshrl.u32 %v505, 7
            %v507 = vsub.s32 0, %v506
            %v508 = vrot.slane %v491, %v507
            %v510 = vmul.f32 %v500, %v508
            %v511 = vmul.f32 %v501, %v508
            %v512 = vmul.f32 %v502, %v508
            %v513 = vmul.f32 %v503, %v508
            %vm514 = vcmask 261120
            %v515 = vsel %vm514, %v510, 0.0
            %516 = vadd.xlane.f32.xlu0 %v515
            %v517 = vpop.xlane.xlu0 %516
            %v518 = vsel %vm514, %v511, 0.0
            %519 = vadd.xlane.f32.xlu0 %v518
            %v520 = vpop.xlane.xlu0 %519
            %v521 = vsel %vm514, %v512, 0.0
            %522 = vadd.xlane.f32.xlu0 %v521
            %v523 = vpop.xlane.xlu0 %522
            %v524 = vsel %vm514, %v513, 0.0
            %525 = vadd.xlane.f32.xlu0 %v524
            %v526 = vpop.xlane.xlu0 %525
            %v527 = vadd.f32 %v517, %v487
            %v528 = vadd.f32 %v520, %v488
            %v529 = vadd.f32 %v523, %v489
            %v530 = vadd.f32 %v526, %v490
            %vm531 = vcmask 7168
            %532 = vst.msk [vmem:[#allocation2] sm:$0xff] %vm531, %v527
            %533 = vst.msk [vmem:[#allocation2 + $0x8] sm:$0xff] %vm531, %v528
            %534 = vst.msk [vmem:[#allocation2 + $0x10] sm:$0xff] %vm531, %v529
            %535 = vst.msk [vmem:[#allocation2 + $0x18] sm:$0xff] %vm531, %v530
            %vm536 = vcmask 15368
            %537 = vst.msk [vmem:[#allocation2] sm:$0xff] %vm536, 0.0
            %538 = vst.msk [vmem:[#allocation2 + $0x8] sm:$0xff] %vm536, 0.0
            %539 = vst.msk [vmem:[#allocation2 + $0x10] sm:$0xff] %vm536, 0.0
            %540 = vst.msk [vmem:[#allocation2 + $0x18] sm:$0xff] %vm536, 0.0
            %541 = vst.msk [vmem:[#allocation3] sm:$0xff] %vm531, -inf
            %542 = vst.msk [vmem:[#allocation3] sm:$0xff] %vm536, 0.0
          $region113: #{tpu_custom_call.1} parent=108 // pred_fallthru
            _
          %v543 = vld [vmem:[%s3] sm:$0xf]
          %v544 = vld [vmem:[%s3 + $0x4] sm:$0xf]
          %v545 = vld [vmem:[%s3 + $0x8] sm:$0xf]
          %v546 = vld [vmem:[%s3 + $0xc] sm:$0xf]
          %v547 = vld [vmem:[%s3 + $0x10] sm:$0xf]
          %v548 = vld [vmem:[%s3 + $0x14] sm:$0xf]
          %v549 = vld [vmem:[%s3 + $0x18] sm:$0xf]
          %v550 = vld [vmem:[%s3 + $0x1c] sm:$0xf]
          %v551 = vld [vmem:[%s3 + $0x20] sm:$0xf]
          %v552 = vld [vmem:[%s3 + $0x24] sm:$0xf]
          %v553 = vld [vmem:[%s3 + $0x28] sm:$0xf]
          %v554 = vld [vmem:[%s3 + $0x2c] sm:$0xf]
          %v567 = vunpack.c.l.b16 %v543
          %v568 = vunpack.c.l.b16 %v544
          %v569 = vunpack.c.l.b16 %v545
          %v570 = vunpack.c.l.b16 %v546
          %v571 = vunpack.c.l.b16 %v547
          %v572 = vunpack.c.l.b16 %v548
          %v573 = vunpack.c.l.b16 %v549
          %v574 = vunpack.c.l.b16 %v550
          %v575 = vunpack.c.l.b16 %v551
          %v576 = vunpack.c.l.b16 %v552
          %v577 = vunpack.c.l.b16 %v553
          %v578 = vunpack.c.l.b16 %v554
          %v579 = vpack.c.b16 %v568, %v567
          %v580 = vpack.c.b16 %v570, %v569
          %v581 = vpack.c.b16 %v572, %v571
          %v582 = vpack.c.b16 %v574, %v573
          %v583 = vpack.c.b16 %v576, %v575
          %v584 = vpack.c.b16 %v578, %v577
          %v589 = vunpack.c.l.b16 %v483
          %v590 = vunpack.c.l.b16 %v484
          %v591 = vunpack.c.l.b16 %v485
          %v592 = vunpack.c.l.b16 %v486
          %v593 = vpack.c.b16 %v590, %v589
          %v594 = vpack.c.b16 %v592, %v591
          %vm597 = vcmask 261120
          %v599 = vsel %vm597, %v579, 0
          %v602 = vsel %vm597, %v580, 0
          %v605 = vsel %vm597, %v581, 0
          %v608 = vsel %vm597, %v582, 0
          %v611 = vsel %vm597, %v583, 0
          %v614 = vsel %vm597, %v584, 0
          %616 = vmatprep.subr.bf16.mxu0 0
          %617 = vmatpush1.bf16.msra.mxu0 %v593
          %618 = vmatprep.subr.bf16.mxu0 0
          %619 = vmatpush1.bf16.msra.mxu0 %v594
          %620 = vmatprep.subr.bf16.mxu0 0
          %621 = vmatpush1.bf16.msra.mxu0 0
          %622 = vmatprep.subr.bf16.mxu0 0
          %623 = vmatpush1.bf16.msra.mxu0 0
          %624 = vmatprep.subr.bf16.mxu0 0
          %625 = vmatpush1.bf16.msra.mxu0 0
          %626 = vmatprep.subr.bf16.mxu0 0
          %627 = vmatpush1.bf16.msra.mxu0 0
          %628 = vmatprep.subr.bf16.mxu0 0
          %629 = vmatpush1.bf16.msra.mxu0 0
          %630 = vmatprep.subr.bf16.mxu0 0
          %631 = vmatpush1.bf16.msra.mxu0 0
          %632 = vmatprep.subr.bf16.mxu0 0
          %633 = vmatpush1.bf16.msra.mxu0 0
          %634 = vmatprep.subr.bf16.mxu0 0
          %635 = vmatpush1.bf16.msra.mxu0 0
          %636 = vmatprep.subr.bf16.mxu0 0
          %637 = vmatpush1.bf16.msra.mxu0 0
          %638 = vmatprep.subr.bf16.mxu0 0
          %639 = vmatpush1.bf16.msra.mxu0 0
          %640 = vmatprep.subr.bf16.mxu0 0
          %641 = vmatpush1.bf16.msra.mxu0 0
          %642 = vmatprep.subr.bf16.mxu0 0
          %643 = vmatpush1.bf16.msra.mxu0 0
          %644 = vmatprep.subr.bf16.mxu0 0
          %645 = vmatpush1.bf16.msra.mxu0 0
          %646 = vmatprep.subr.bf16.mxu0 0
          %647 = vmatpush1.bf16.msra.mxu0 0
          %648 = vmatprep.mubr.bf16.mxu0 0
          %649 = vmatmul.mubr.bf16.gmra.mrb[0].mxu0 %v599
          %v650 = vpop.f32.mrb[0].mxu0
          %v651 = vadd.f32 0.0, %v650
          %v652 = vpop.f32.mrb[0].mxu0
          %v653 = vpop.f32.mrb[0].mxu0
          %v654 = vadd.f32 0.0, %v653
          %v655 = vpop.f32.mrb[0].mxu0
          %656 = vmatprep.mubr.bf16.mxu0 0
          %657 = vmatmul.mubr.bf16.gmra.mrb[0].mxu0 %v602
          %v658 = vpop.f32.mrb[0].mxu0
          %v659 = vadd.f32 0.0, %v658
          %v660 = vpop.f32.mrb[0].mxu0
          %v661 = vpop.f32.mrb[0].mxu0
          %v662 = vadd.f32 0.0, %v661
          %v663 = vpop.f32.mrb[0].mxu0
          %664 = vmatprep.mubr.bf16.mxu0 0
          %665 = vmatmul.mubr.bf16.gmra.mrb[0].mxu0 %v605
          %v666 = vpop.f32.mrb[0].mxu0
          %v667 = vadd.f32 0.0, %v666
          %v668 = vpop.f32.mrb[0].mxu0
          %v669 = vpop.f32.mrb[0].mxu0
          %v670 = vadd.f32 0.0, %v669
          %v671 = vpop.f32.mrb[0].mxu0
          %672 = vmatprep.mubr.bf16.mxu0 0
          %673 = vmatmul.mubr.bf16.gmra.mrb[0].mxu0 %v608
          %v674 = vpop.f32.mrb[0].mxu0
          %v675 = vadd.f32 0.0, %v674
          %v676 = vpop.f32.mrb[0].mxu0
          %v677 = vpop.f32.mrb[0].mxu0
          %v678 = vadd.f32 0.0, %v677
          %v679 = vpop.f32.mrb[0].mxu0
          %680 = vmatprep.mubr.bf16.mxu0 0
          %681 = vmatmul.mubr.bf16.gmra.mrb[0].mxu0 %v611
          %v682 = vpop.f32.mrb[0].mxu0
          %v683 = vadd.f32 0.0, %v682
          %v684 = vpop.f32.mrb[0].mxu0
          %v685 = vpop.f32.mrb[0].mxu0
          %v686 = vadd.f32 0.0, %v685
          %v687 = vpop.f32.mrb[0].mxu0
          %688 = vmatprep.mubr.bf16.mxu0 0
          %689 = vmatmul.mubr.bf16.gmra.mrb[0].mxu0 %v614
          %v690 = vpop.f32.mrb[0].mxu0
          %v691 = vadd.f32 0.0, %v690
          %v692 = vpop.f32.mrb[0].mxu0
          %v693 = vpop.f32.mrb[0].mxu0
          %v694 = vadd.f32 0.0, %v693
          %v695 = vpop.f32.mrb[0].mxu0
          %696 = vdwg.mxu0
          %698 = vset.pattern.permute.xlu0 1
          %699 = vperm.xlu0 %698, %v487
          %v700 = vpop.permute.xlu0 %699
          %703 = vset.pattern.permute.xlu0 1
          %704 = vperm.xlu0 %703, %v488
          %v705 = vpop.permute.xlu0 %704
          %708 = vset.pattern.permute.xlu0 1
          %709 = vperm.xlu0 %708, %v489
          %v710 = vpop.permute.xlu0 %709
          %713 = vset.pattern.permute.xlu0 1
          %714 = vperm.xlu0 %713, %v490
          %v715 = vpop.permute.xlu0 %714
          %v717 = vadd.f32 %v651, %v700
          %v718 = vadd.f32 %v654, %v705
          %v719 = vadd.f32 %v659, %v710
          %v720 = vadd.f32 %v662, %v715
          %721 = vset.pattern.permute.xlu0 2
          %722 = vperm.xlu0 %721, %v487
          %v723 = vpop.permute.xlu0 %722
          %725 = vset.pattern.permute.xlu0 2
          %726 = vperm.xlu0 %725, %v488
          %v727 = vpop.permute.xlu0 %726
          %729 = vset.pattern.permute.xlu0 2
          %730 = vperm.xlu0 %729, %v489
          %v731 = vpop.permute.xlu0 %730
          %733 = vset.pattern.permute.xlu0 2
          %734 = vperm.xlu0 %733, %v490
          %v735 = vpop.permute.xlu0 %734
          %v737 = vadd.f32 %v667, %v723
          %v738 = vadd.f32 %v670, %v727
          %v739 = vadd.f32 %v675, %v731
          %v740 = vadd.f32 %v678, %v735
          %v741 = vpack.c.bf16 %v686, %v683
          %v742 = vpack.c.bf16 %v694, %v691
          %s743 = smul.u32 %s32, 2
          %s744 = smul.addr %s743, 8
          %s745 = scalar_lea.vmem [#allocation4], %s744
          %746 = vst [vmem:[%s745] sm:$0xff] %v741
          %747 = vst [vmem:[%s745 + $0x8] sm:$0xff] %v742
          %v748 = vld [vmem:[#allocation2] sm:$0xff]
          %v749 = vld [vmem:[#allocation2 + $0x8] sm:$0xff]
          %v750 = vld [vmem:[#allocation2 + $0x10] sm:$0xff]
          %v751 = vld [vmem:[#allocation2 + $0x18] sm:$0xff]
          %v752 = vld [vmem:[#allocation6] sm:$0xf]
          %754 = vset.pattern.permute.xlu0 0
          %755 = vperm.xlu0 %754, %v748
          %v756 = vpop.permute.xlu0 %755
          %759 = vset.pattern.permute.xlu0 0
          %760 = vperm.xlu0 %759, %v749
          %v761 = vpop.permute.xlu0 %760
          %764 = vset.pattern.permute.xlu0 0
          %765 = vperm.xlu0 %764, %v750
          %v766 = vpop.permute.xlu0 %765
          %769 = vset.pattern.permute.xlu0 0
          %770 = vperm.xlu0 %769, %v751
          %v771 = vpop.permute.xlu0 %770
          %v773 = vmul.f32 %v717, %v756
          %v774 = vmul.f32 %v718, %v761
          %v775 = vmul.f32 %v719, %v766
          %v776 = vmul.f32 %v720, %v771
          %v777 = vpack.c.bf16 %v774, %v773
          %v778 = vpack.c.bf16 %v776, %v775
          %v780 = vsel %vm597, %v752, 0
          %782 = vmatprep.subr.bf16.mxu0 0
          %783 = vmatpush1.bf16.msra.mxu0 %v777
          %784 = vmatprep.subr.bf16.mxu0 0
          %785 = vmatpush1.bf16.msra.mxu0 %v778
          %786 = vmatprep.subr.bf16.mxu0 0
          %787 = vmatpush1.bf16.msra.mxu0 0
          %788 = vmatprep.subr.bf16.mxu0 0
          %789 = vmatpush1.bf16.msra.mxu0 0
          %790 = vmatprep.subr.bf16.mxu0 0
          %791 = vmatpush1.bf16.msra.mxu0 0
          %792 = vmatprep.subr.bf16.mxu0 0
          %793 = vmatpush1.bf16.msra.mxu0 0
          %794 = vmatprep.subr.bf16.mxu0 0
          %795 = vmatpush1.bf16.msra.mxu0 0
          %796 = vmatprep.subr.bf16.mxu0 0
          %797 = vmatpush1.bf16.msra.mxu0 0
          %798 = vmatprep.subr.bf16.mxu0 0
          %799 = vmatpush1.bf16.msra.mxu0 0
          %800 = vmatprep.subr.bf16.mxu0 0
          %801 = vmatpush1.bf16.msra.mxu0 0
          %802 = vmatprep.subr.bf16.mxu0 0
          %803 = vmatpush1.bf16.msra.mxu0 0
          %804 = vmatprep.subr.bf16.mxu0 0
          %805 = vmatpush1.bf16.msra.mxu0 0
          %806 = vmatprep.subr.bf16.mxu0 0
          %807 = vmatpush1.bf16.msra.mxu0 0
          %808 = vmatprep.subr.bf16.mxu0 0
          %809 = vmatpush1.bf16.msra.mxu0 0
          %810 = vmatprep.subr.bf16.mxu0 0
          %811 = vmatpush1.bf16.msra.mxu0 0
          %812 = vmatprep.subr.bf16.mxu0 0
          %813 = vmatpush1.bf16.msra.mxu0 0
          %814 = vmatprep.mubr.bf16.mxu0 0
          %815 = vmatmul.mubr.bf16.gmra.mrb[0].mxu0 %v780
          %v816 = vpop.f32.mrb[0].mxu0
          %v817 = vadd.f32 0.0, %v816
          %v818 = vpop.f32.mrb[0].mxu0
          %v819 = vpop.f32.mrb[0].mxu0
          %v820 = vpop.f32.mrb[0].mxu0
          %821 = vdwg.mxu0
          %v822 = vld [vmem:[#allocation3] sm:$0xff]
          %823 = vmax.xlane.f32.xlu0 %v817
          %v824 = vpop.xlane.xlu0 %823
          %v825 = vmax.f32 %v822, %v824
          %v826 = vsub.f32 %v822, %v825
          %v827 = vmul.f32 %v826, 1.442695
          %v828 = vpow.pop %v827
          %830 = vset.pattern.permute.xlu0 0
          %831 = vperm.xlu0 %830, %v825
          %v832 = vpop.permute.xlu0 %831
          %v834 = vsub.f32 %v817, %v832
          %v835 = vmul.f32 %v834, 1.442695
          %v836 = vpow.pop %v835
          %vm837 = vcmask 7168
          %838 = vst.msk [vmem:[#allocation3] sm:$0xff] %vm837, %v825
          %840 = vrot.lane.b32.xlu0 %v822, 127
          %v841 = vpop.permute.xlu0 %840
          %v843 = vmul.f32 %v828, %v841
          %844 = vadd.xlane.f32.xlu0 %v836
          %v845 = vpop.xlane.xlu0 %844
          %v846 = vadd.f32 %v843, %v845
          %848 = vrot.lane.b32.xlu0 %v846, 1
          %v849 = vpop.permute.xlu0 %848
          %vm851 = vcmask 15368
          %852 = vst.msk [vmem:[#allocation3] sm:$0xff] %vm851, %v849
          %v853 = vld [vmem:[%s7] sm:$0xf]
          %v854 = vld [vmem:[%s7 + $0x4] sm:$0xf]
          %v855 = vld [vmem:[%s7 + $0x8] sm:$0xf]
          %v856 = vld [vmem:[%s7 + $0xc] sm:$0xf]
          %v857 = vpack.c.bf16 %v836, %v836
          %v862 = vunpack.c.l.b16 %v853
          %v863 = vunpack.c.l.b16 %v854
          %v864 = vunpack.c.l.b16 %v855
          %v865 = vunpack.c.l.b16 %v856
          %v866 = vpack.c.b16 %v863, %v862
          %v867 = vpack.c.b16 %v865, %v864
          %vm868 = vcmask 64512
          %v870 = vsel %vm868, %v866, 0
          %v873 = vsel %vm868, %v867, 0
          %vm875 = vcmask 1043456
          %v877 = vsel %vm875, %v857, 0
          %879 = vmatprep.subr.bf16.mxu0 0
          %880 = vmatpush1.bf16.msra.mxu0 %v877
          %881 = vmatprep.subr.bf16.mxu0 0
          %882 = vmatpush1.bf16.msra.mxu0 0
          %883 = vmatprep.subr.bf16.mxu0 0
          %884 = vmatpush1.bf16.msra.mxu0 0
          %885 = vmatprep.subr.bf16.mxu0 0
          %886 = vmatpush1.bf16.msra.mxu0 0
          %887 = vmatprep.subr.bf16.mxu0 0
          %888 = vmatpush1.bf16.msra.mxu0 0
          %889 = vmatprep.subr.bf16.mxu0 0
          %890 = vmatpush1.bf16.msra.mxu0 0
          %891 = vmatprep.subr.bf16.mxu0 0
          %892 = vmatpush1.bf16.msra.mxu0 0
          %893 = vmatprep.subr.bf16.mxu0 0
          %894 = vmatpush1.bf16.msra.mxu0 0
          %895 = vmatprep.subr.bf16.mxu0 0
          %896 = vmatpush1.bf16.msra.mxu0 0
          %897 = vmatprep.subr.bf16.mxu0 0
          %898 = vmatpush1.bf16.msra.mxu0 0
          %899 = vmatprep.subr.bf16.mxu0 0
          %900 = vmatpush1.bf16.msra.mxu0 0
          %901 = vmatprep.subr.bf16.mxu0 0
          %902 = vmatpush1.bf16.msra.mxu0 0
          %903 = vmatprep.subr.bf16.mxu0 0
          %904 = vmatpush1.bf16.msra.mxu0 0
          %905 = vmatprep.subr.bf16.mxu0 0
          %906 = vmatpush1.bf16.msra.mxu0 0
          %907 = vmatprep.subr.bf16.mxu0 0
          %908 = vmatpush1.bf16.msra.mxu0 0
          %909 = vmatprep.subr.bf16.mxu0 0
          %910 = vmatpush1.bf16.msra.mxu0 0
          %911 = vmatprep.mubr.bf16.mxu0 0
          %912 = vmatmul.mubr.bf16.gmra.mrb[0].mxu0 %v870
          %v913 = vpop.f32.mrb[0].mxu0
          %v914 = vadd.f32 0.0, %v913
          %v915 = vpop.f32.mrb[0].mxu0
          %v916 = vpop.f32.mrb[0].mxu0
          %v917 = vadd.f32 0.0, %v916
          %v918 = vpop.f32.mrb[0].mxu0
          %919 = vmatprep.mubr.bf16.mxu0 0
          %920 = vmatmul.mubr.bf16.gmra.mrb[0].mxu0 %v873
          %v921 = vpop.f32.mrb[0].mxu0
          %v922 = vadd.f32 0.0, %v921
          %v923 = vpop.f32.mrb[0].mxu0
          %v924 = vpop.f32.mrb[0].mxu0
          %v925 = vadd.f32 0.0, %v924
          %v926 = vpop.f32.mrb[0].mxu0
          %927 = vdwg.mxu0
          %v928 = vunpack.c.l.bf16 %v853
          %v929 = vunpack.c.l.bf16 %v854
          %v930 = vunpack.c.l.bf16 %v855
          %v931 = vunpack.c.l.bf16 %v856
          %v933 = vsel %vm868, %v928, 0
          %v936 = vsel %vm868, %v929, 0
          %v939 = vsel %vm868, %v930, 0
          %v942 = vsel %vm868, %v931, 0
          %944 = vmatprep.subr.mxu0 0.0
          %945 = vmatpush1.msra.mxu0 %v828
          %946 = vmatprep.subr.mxu0 0.0
          %947 = vmatpush1.msra.mxu0 0.0
          %948 = vmatprep.subr.mxu0 0.0
          %949 = vmatpush1.msra.mxu0 0.0
          %950 = vmatprep.subr.mxu0 0.0
          %951 = vmatpush1.msra.mxu0 0.0
          %952 = vmatprep.subr.mxu0 0.0
          %953 = vmatpush1.msra.mxu0 0.0
          %954 = vmatprep.subr.mxu0 0.0
          %955 = vmatpush1.msra.mxu0 0.0
          %956 = vmatprep.subr.mxu0 0.0
          %957 = vmatpush1.msra.mxu0 0.0
          %958 = vmatprep.subr.mxu0 0.0
          %959 = vmatpush1.msra.mxu0 0.0
          %960 = vmatprep.subr.mxu0 0.0
          %961 = vmatpush1.msra.mxu0 0.0
          %962 = vmatprep.subr.mxu0 0.0
          %963 = vmatpush1.msra.mxu0 0.0
          %964 = vmatprep.subr.mxu0 0.0
          %965 = vmatpush1.msra.mxu0 0.0
          %966 = vmatprep.subr.mxu0 0.0
          %967 = vmatpush1.msra.mxu0 0.0
          %968 = vmatprep.subr.mxu0 0.0
          %969 = vmatpush1.msra.mxu0 0.0
          %970 = vmatprep.subr.mxu0 0.0
          %971 = vmatpush1.msra.mxu0 0.0
          %972 = vmatprep.subr.mxu0 0.0
          %973 = vmatpush1.msra.mxu0 0.0
          %974 = vmatprep.subr.mxu0 0.0
          %975 = vmatpush1.msra.mxu0 0.0
          %976 = vmatprep.subr.mxu0 0.0
          %977 = vmatpush1.msra.mxu0 0.0
          %978 = vmatprep.subr.mxu0 0.0
          %979 = vmatpush1.msra.mxu0 0.0
          %980 = vmatprep.subr.mxu0 0.0
          %981 = vmatpush1.msra.mxu0 0.0
          %982 = vmatprep.subr.mxu0 0.0
          %983 = vmatpush1.msra.mxu0 0.0
          %984 = vmatprep.subr.mxu0 0.0
          %985 = vmatpush1.msra.mxu0 0.0
          %986 = vmatprep.subr.mxu0 0.0
          %987 = vmatpush1.msra.mxu0 0.0
          %988 = vmatprep.subr.mxu0 0.0
          %989 = vmatpush1.msra.mxu0 0.0
          %990 = vmatprep.subr.mxu0 0.0
          %991 = vmatpush1.msra.mxu0 0.0
          %992 = vmatprep.subr.mxu0 0.0
          %993 = vmatpush1.msra.mxu0 0.0
          %994 = vmatprep.subr.mxu0 0.0
          %995 = vmatpush1.msra.mxu0 0.0
          %996 = vmatprep.subr.mxu0 0.0
          %997 = vmatpush1.msra.mxu0 0.0
          %998 = vmatprep.subr.mxu0 0.0
          %999 = vmatpush1.msra.mxu0 0.0
          %1000 = vmatprep.subr.mxu0 0.0
          %1001 = vmatpush1.msra.mxu0 0.0
          %1002 = vmatprep.subr.mxu0 0.0
          %1003 = vmatpush1.msra.mxu0 0.0
          %1004 = vmatprep.subr.mxu0 0.0
          %1005 = vmatpush1.msra.mxu0 0.0
          %1006 = vmatprep.subr.mxu0 0.0
          %1007 = vmatpush1.msra.mxu0 0.0
          %1008 = vmatprep.mubr.f32.mxu0 0.0
          %1009 = vmatmul.mubr.f32.gmra.mrb[0].mxu0 %v933
          %v1010 = vpop.f32.mrb[0].mxu0
          %v1011 = vadd.f32 0.0, %v1010
          %v1012 = vpop.f32.mrb[0].mxu0
          %1013 = vmatprep.mubr.f32.mxu0 0.0
          %1014 = vmatmul.mubr.f32.gmra.mrb[0].mxu0 %v936
          %v1015 = vpop.f32.mrb[0].mxu0
          %v1016 = vadd.f32 0.0, %v1015
          %v1017 = vpop.f32.mrb[0].mxu0
          %1018 = vmatprep.mubr.f32.mxu0 0.0
          %1019 = vmatmul.mubr.f32.gmra.mrb[0].mxu0 %v939
          %v1020 = vpop.f32.mrb[0].mxu0
          %v1021 = vadd.f32 0.0, %v1020
          %v1022 = vpop.f32.mrb[0].mxu0
          %1023 = vmatprep.mubr.f32.mxu0 0.0
          %1024 = vmatmul.mubr.f32.gmra.mrb[0].mxu0 %v942
          %v1025 = vpop.f32.mrb[0].mxu0
          %v1026 = vadd.f32 0.0, %v1025
          %v1027 = vpop.f32.mrb[0].mxu0
          %1028 = vdwg.mxu0
          %v1029 = vld [vmem:[#allocation2] sm:$0xff]
          %v1030 = vld [vmem:[#allocation2 + $0x8] sm:$0xff]
          %v1031 = vld [vmem:[#allocation2 + $0x10] sm:$0xff]
          %v1032 = vld [vmem:[#allocation2 + $0x18] sm:$0xff]
          %1037 = vrot.lane.b32.xlu0 %v1029, 127
          %v1038 = vpop.permute.xlu0 %1037
          %1039 = vrot.lane.b32.xlu0 %v1030, 127
          %v1040 = vpop.permute.xlu0 %1039
          %1041 = vrot.lane.b32.xlu0 %v1031, 127
          %v1042 = vpop.permute.xlu0 %1041
          %1043 = vrot.lane.b32.xlu0 %v1032, 127
          %v1044 = vpop.permute.xlu0 %1043
          %v1049 = vmul.f32 %v1011, %v1038
          %v1050 = vmul.f32 %v1016, %v1040
          %v1051 = vmul.f32 %v1021, %v1042
          %v1052 = vmul.f32 %v1026, %v1044
          %v1053 = vmul.f32 %v737, %v914
          %v1054 = vmul.f32 %v738, %v917
          %v1055 = vmul.f32 %v739, %v922
          %v1056 = vmul.f32 %v740, %v925
          %1057 = vadd.xlane.f32.xlu0 %v1053
          %v1058 = vpop.xlane.xlu0 %1057
          %1059 = vadd.xlane.f32.xlu0 %v1054
          %v1060 = vpop.xlane.xlu0 %1059
          %1061 = vadd.xlane.f32.xlu0 %v1055
          %v1062 = vpop.xlane.xlu0 %1061
          %1063 = vadd.xlane.f32.xlu0 %v1056
          %v1064 = vpop.xlane.xlu0 %1063
          %v1065 = vadd.f32 %v1049, %v1058
          %v1066 = vadd.f32 %v1050, %v1060
          %v1067 = vadd.f32 %v1051, %v1062
          %v1068 = vadd.f32 %v1052, %v1064
          %1073 = vrot.lane.b32.xlu0 %v1065, 1
          %v1074 = vpop.permute.xlu0 %1073
          %1075 = vrot.lane.b32.xlu0 %v1066, 1
          %v1076 = vpop.permute.xlu0 %1075
          %1077 = vrot.lane.b32.xlu0 %v1067, 1
          %v1078 = vpop.permute.xlu0 %1077
          %1079 = vrot.lane.b32.xlu0 %v1068, 1
          %v1080 = vpop.permute.xlu0 %1079
          %1085 = vst.msk [vmem:[#allocation2] sm:$0xff] %vm851, %v1074
          %1086 = vst.msk [vmem:[#allocation2 + $0x8] sm:$0xff] %vm851, %v1076
          %1087 = vst.msk [vmem:[#allocation2 + $0x10] sm:$0xff] %vm851, %v1078
          %1088 = vst.msk [vmem:[#allocation2 + $0x18] sm:$0xff] %vm851, %v1080
          %p1089 = scmp.eq.s32.totalorder %s32, 1
          // Predicated region
          $region114: #{tpu_custom_call.1} parent=108 // pred_check
            %p1090 = pneg %p1089
          $region115: #{tpu_custom_call.1} parent=108 // pred_check_branch
            %1092 = sbr.rel (%p1090) target = $region117
          $region116: #{tpu_custom_call.1} parent=108 // pred_region
            %v1093 = vld [vmem:[%s9] sm:$0xff]
            %v1094 = vld [vmem:[#allocation3] sm:$0xff]
            %v1095 = vrcp.pop %v1094
            %v1096 = vmul.f32 1.0, %v1095
            %1098 = vrot.lane.b32.xlu0 %v1096, 127
            %v1099 = vpop.permute.xlu0 %1098
            %1101 = vmatprep.subr.mxu0 0.0
            %1102 = vmatpush1.msra.mxu0 %v1099
            %1103 = vmatprep.subr.mxu0 0.0
            %1104 = vmatpush1.msra.mxu0 0.0
            %1105 = vmatprep.subr.mxu0 0.0
            %1106 = vmatpush1.msra.mxu0 0.0
            %1107 = vmatprep.subr.mxu0 0.0
            %1108 = vmatpush1.msra.mxu0 0.0
            %1109 = vmatprep.subr.mxu0 0.0
            %1110 = vmatpush1.msra.mxu0 0.0
            %1111 = vmatprep.subr.mxu0 0.0
            %1112 = vmatpush1.msra.mxu0 0.0
            %1113 = vmatprep.subr.mxu0 0.0
            %1114 = vmatpush1.msra.mxu0 0.0
            %1115 = vmatprep.subr.mxu0 0.0
            %1116 = vmatpush1.msra.mxu0 0.0
            %1117 = vmatprep.subr.mxu0 0.0
            %1118 = vmatpush1.msra.mxu0 0.0
            %1119 = vmatprep.subr.mxu0 0.0
            %1120 = vmatpush1.msra.mxu0 0.0
            %1121 = vmatprep.subr.mxu0 0.0
            %1122 = vmatpush1.msra.mxu0 0.0
            %1123 = vmatprep.subr.mxu0 0.0
            %1124 = vmatpush1.msra.mxu0 0.0
            %1125 = vmatprep.subr.mxu0 0.0
            %1126 = vmatpush1.msra.mxu0 0.0
            %1127 = vmatprep.subr.mxu0 0.0
            %1128 = vmatpush1.msra.mxu0 0.0
            %1129 = vmatprep.subr.mxu0 0.0
            %1130 = vmatpush1.msra.mxu0 0.0
            %1131 = vmatprep.subr.mxu0 0.0
            %1132 = vmatpush1.msra.mxu0 0.0
            %1133 = vmatprep.subr.mxu0 0.0
            %1134 = vmatpush1.msra.mxu0 0.0
            %1135 = vmatprep.subr.mxu0 0.0
            %1136 = vmatpush1.msra.mxu0 0.0
            %1137 = vmatprep.subr.mxu0 0.0
            %1138 = vmatpush1.msra.mxu0 0.0
            %1139 = vmatprep.subr.mxu0 0.0
            %1140 = vmatpush1.msra.mxu0 0.0
            %1141 = vmatprep.subr.mxu0 0.0
            %1142 = vmatpush1.msra.mxu0 0.0
            %1143 = vmatprep.subr.mxu0 0.0
            %1144 = vmatpush1.msra.mxu0 0.0
            %1145 = vmatprep.subr.mxu0 0.0
            %1146 = vmatpush1.msra.mxu0 0.0
            %1147 = vmatprep.subr.mxu0 0.0
            %1148 = vmatpush1.msra.mxu0 0.0
            %1149 = vmatprep.subr.mxu0 0.0
            %1150 = vmatpush1.msra.mxu0 0.0
            %1151 = vmatprep.subr.mxu0 0.0
            %1152 = vmatpush1.msra.mxu0 0.0
            %1153 = vmatprep.subr.mxu0 0.0
            %1154 = vmatpush1.msra.mxu0 0.0
            %1155 = vmatprep.subr.mxu0 0.0
            %1156 = vmatpush1.msra.mxu0 0.0
            %1157 = vmatprep.subr.mxu0 0.0
            %1158 = vmatpush1.msra.mxu0 0.0
            %1159 = vmatprep.subr.mxu0 0.0
            %1160 = vmatpush1.msra.mxu0 0.0
            %1161 = vmatprep.subr.mxu0 0.0
            %1162 = vmatpush1.msra.mxu0 0.0
            %1163 = vmatprep.subr.mxu0 0.0
            %1164 = vmatpush1.msra.mxu0 0.0
            %1165 = vmatprep.mubr.f32.mxu0 0.0
            %1166 = vmatmul.mubr.f32.gmra.mrb[0].mxu0 %v933
            %v1167 = vpop.f32.mrb[0].mxu0
            %v1168 = vadd.f32 0.0, %v1167
            %v1169 = vpop.f32.mrb[0].mxu0
            %1170 = vmatprep.mubr.f32.mxu0 0.0
            %1171 = vmatmul.mubr.f32.gmra.mrb[0].mxu0 %v936
            %v1172 = vpop.f32.mrb[0].mxu0
            %v1173 = vadd.f32 0.0, %v1172
            %v1174 = vpop.f32.mrb[0].mxu0
            %1175 = vmatprep.mubr.f32.mxu0 0.0
            %1176 = vmatmul.mubr.f32.gmra.mrb[0].mxu0 %v939
            %v1177 = vpop.f32.mrb[0].mxu0
            %v1178 = vadd.f32 0.0, %v1177
            %v1179 = vpop.f32.mrb[0].mxu0
            %1180 = vmatprep.mubr.f32.mxu0 0.0
            %1181 = vmatmul.mubr.f32.gmra.mrb[0].mxu0 %v942
            %v1182 = vpop.f32.mrb[0].mxu0
            %v1183 = vadd.f32 0.0, %v1182
            %v1184 = vpop.f32.mrb[0].mxu0
            %1185 = vdwg.mxu0
            %v1186 = vld [vmem:[#allocation2] sm:$0xff]
            %v1187 = vld [vmem:[#allocation2 + $0x8] sm:$0xff]
            %v1188 = vld [vmem:[#allocation2 + $0x10] sm:$0xff]
            %v1189 = vld [vmem:[#allocation2 + $0x18] sm:$0xff]
            %1194 = vrot.lane.b32.xlu0 %v1168, 1
            %v1195 = vpop.permute.xlu0 %1194
            %1196 = vrot.lane.b32.xlu0 %v1173, 1
            %v1197 = vpop.permute.xlu0 %1196
            %1198 = vrot.lane.b32.xlu0 %v1178, 1
            %v1199 = vpop.permute.xlu0 %1198
            %1200 = vrot.lane.b32.xlu0 %v1183, 1
            %v1201 = vpop.permute.xlu0 %1200
            %v1206 = vmul.f32 %v1186, %v1195
            %v1207 = vmul.f32 %v1187, %v1197
            %v1208 = vmul.f32 %v1188, %v1199
            %v1209 = vmul.f32 %v1189, %v1201
            %v1210 = vld [vmem:[%s4] sm:$0xf]
            %v1211 = vld [vmem:[%s4 + $0x4] sm:$0xf]
            %v1212 = vld [vmem:[%s4 + $0x8] sm:$0xf]
            %v1213 = vld [vmem:[%s4 + $0xc] sm:$0xf]
            %v1214 = vunpack.c.l.bf16 %v1210
            %v1215 = vunpack.c.l.bf16 %v1211
            %v1216 = vunpack.c.l.bf16 %v1212
            %v1217 = vunpack.c.l.bf16 %v1213
            %1219 = vset.pattern.permute.xlu0 1
            %1220 = vperm.xlu0 %1219, %v1206
            %v1221 = vpop.permute.xlu0 %1220
            %1224 = vset.pattern.permute.xlu0 1
            %1225 = vperm.xlu0 %1224, %v1207
            %v1226 = vpop.permute.xlu0 %1225
            %1229 = vset.pattern.permute.xlu0 1
            %1230 = vperm.xlu0 %1229, %v1208
            %v1231 = vpop.permute.xlu0 %1230
            %1234 = vset.pattern.permute.xlu0 1
            %1235 = vperm.xlu0 %1234, %v1209
            %v1236 = vpop.permute.xlu0 %1235
            %v1238 = vmul.f32 %v1214, %v1221
            %v1239 = vmul.f32 %v1215, %v1226
            %v1240 = vmul.f32 %v1216, %v1231
            %v1241 = vmul.f32 %v1217, %v1236
            %v1242 = vsel %vm597, %v1238, 0.0
            %v1243 = vsel %vm597, %v1239, 0.0
            %v1244 = vadd.f32 %v1242, %v1243
            %v1245 = vsel %vm597, %v1240, 0.0
            %v1246 = vadd.f32 %v1244, %v1245
            %v1247 = vsel %vm597, %v1241, 0.0
            %v1248 = vadd.f32 %v1246, %v1247
            %v1249 = vrot.slane %v1248, 4
            %v1250 = vadd.f32 %v1248, %v1249
            %v1251 = vrot.slane %v1250, 2
            %v1252 = vadd.f32 %v1250, %v1251
            %v1253 = vrot.slane %v1252, 1
            %v1254 = vadd.f32 %v1252, %v1253
            %v1255 = vadd.f32 %v1254, %v1093
            %v1257 = vrot.slane %v1255, 7
            %v1259 = vmul.f32 %v1093, %v1257
            %v1262 = vunpack.c.l.s4 1966171168
            %v1263 = vunpack.c.0.s8 %v1262
            %v1264 = vlaneseq
            %v1265 = vshrl.u32 %v1264, 7
            %v1266 = vsub.s32 %v1263, %v1265
            %v1267 = vrot.slane %v1259, %v1266
            %v1268 = vcombine.high %v1267, %v1267
            %v1270 = vunpack.c.l.s4 1966171168
            %v1271 = vunpack.c.0.s8 %v1270
            %v1272 = vlaneseq
            %v1273 = vshrl.u32 %v1272, 7
            %v1274 = vsub.s32 %v1271, %v1273
            %v1275 = vrot.slane %v1268, %v1274
            %v1277 = vadd.f32 %v491, %v1275
            %v1278 = vld [vmem:[%s5] sm:$0xf]
            %v1279 = vld [vmem:[%s5 + $0x4] sm:$0xf]
            %v1280 = vld [vmem:[%s5 + $0x8] sm:$0xf]
            %v1281 = vld [vmem:[%s5 + $0xc] sm:$0xf]
            %v1282 = vunpack.c.l.bf16 %v1278
            %v1283 = vunpack.c.l.bf16 %v1279
            %v1284 = vunpack.c.l.bf16 %v1280
            %v1285 = vunpack.c.l.bf16 %v1281
            %v1287 = vlaneseq
            %v1288 = vshrl.u32 %v1287, 7
            %v1289 = vsub.s32 0, %v1288
            %v1290 = vrot.slane %v1277, %v1289
            %v1292 = vmul.f32 %v1282, %v1290
            %v1293 = vmul.f32 %v1283, %v1290
            %v1294 = vmul.f32 %v1284, %v1290
            %v1295 = vmul.f32 %v1285, %v1290
            %v1296 = vsel %vm597, %v1292, 0.0
            %1297 = vadd.xlane.f32.xlu0 %v1296
            %v1298 = vpop.xlane.xlu0 %1297
            %v1299 = vsel %vm597, %v1293, 0.0
            %1300 = vadd.xlane.f32.xlu0 %v1299
            %v1301 = vpop.xlane.xlu0 %1300
            %v1302 = vsel %vm597, %v1294, 0.0
            %1303 = vadd.xlane.f32.xlu0 %v1302
            %v1304 = vpop.xlane.xlu0 %1303
            %v1305 = vsel %vm597, %v1295, 0.0
            %1306 = vadd.xlane.f32.xlu0 %v1305
            %v1307 = vpop.xlane.xlu0 %1306
            %v1308 = vadd.f32 %v1298, %v487
            %v1309 = vadd.f32 %v1301, %v488
            %v1310 = vadd.f32 %v1304, %v489
            %v1311 = vadd.f32 %v1307, %v490
            %1316 = vrot.lane.b32.xlu0 %v1308, 127
            %v1317 = vpop.permute.xlu0 %1316
            %1318 = vrot.lane.b32.xlu0 %v1309, 127
            %v1319 = vpop.permute.xlu0 %1318
            %1320 = vrot.lane.b32.xlu0 %v1310, 127
            %v1321 = vpop.permute.xlu0 %1320
            %1322 = vrot.lane.b32.xlu0 %v1311, 127
            %v1323 = vpop.permute.xlu0 %1322
            %vm1328 = vcmask 23568
            %1329 = vst.msk [vmem:[#allocation2] sm:$0xff] %vm1328, %v1317
            %1330 = vst.msk [vmem:[#allocation2 + $0x8] sm:$0xff] %vm1328, %v1319
            %1331 = vst.msk [vmem:[#allocation2 + $0x10] sm:$0xff] %vm1328, %v1321
            %1332 = vst.msk [vmem:[#allocation2 + $0x18] sm:$0xff] %vm1328, %v1323
          $region117: #{tpu_custom_call.1} parent=108 // pred_fallthru
            _
        $region109: #{tpu_custom_call.1} parent=96 // pred_fallthru
          _
        %p1333 = scmp.eq.s32.totalorder %s31, 1
        // Predicated region
        $region118: #{tpu_custom_call.1} parent=96 // pred_check
          %p1334 = pneg %p1333
        $region119: #{tpu_custom_call.1} parent=96 // pred_check_branch
          %1336 = sbr.rel (%p1334) target = $region121
        $region120: #{tpu_custom_call.1} parent=96 // pred_region
          %s1337 = smul.u32 %s32, 2
          %s1338 = smul.addr %s1337, 8
          %s1339 = scalar_lea.vmem [#allocation4], %s1338
          %v1340 = vld [vmem:[%s1339] sm:$0xff]
          %v1341 = vld [vmem:[%s1339 + $0x8] sm:$0xff]
          %v1342 = vunpack.c.l.bf16 %v1340
          %v1343 = vunpack.c.h.bf16 %v1340
          %v1344 = vunpack.c.l.bf16 %v1341
          %v1345 = vunpack.c.h.bf16 %v1341
          %v1346 = vld [vmem:[#allocation2] sm:$0xff]
          %v1347 = vld [vmem:[#allocation2 + $0x8] sm:$0xff]
          %v1348 = vld [vmem:[#allocation2 + $0x10] sm:$0xff]
          %v1349 = vld [vmem:[#allocation2 + $0x18] sm:$0xff]
          %1351 = vset.pattern.permute.xlu0 2
          %1352 = vperm.xlu0 %1351, %v1346
          %v1353 = vpop.permute.xlu0 %1352
          %1356 = vset.pattern.permute.xlu0 2
          %1357 = vperm.xlu0 %1356, %v1347
          %v1358 = vpop.permute.xlu0 %1357
          %1361 = vset.pattern.permute.xlu0 2
          %1362 = vperm.xlu0 %1361, %v1348
          %v1363 = vpop.permute.xlu0 %1362
          %1366 = vset.pattern.permute.xlu0 2
          %1367 = vperm.xlu0 %1366, %v1349
          %v1368 = vpop.permute.xlu0 %1367
          %v1370 = vadd.f32 %v1342, %v1353
          %v1371 = vadd.f32 %v1343, %v1358
          %v1372 = vadd.f32 %v1344, %v1363
          %v1373 = vadd.f32 %v1345, %v1368
          %v1374 = vpack.c.bf16 %v1371, %v1370
          %v1375 = vpack.c.bf16 %v1373, %v1372
          %v1378 = vunpack.c.l.b16 %v1374
          %v1379 = vunpack.c.h.b16 %v1374
          %v1380 = vunpack.c.l.b16 %v1375
          %v1381 = vunpack.c.h.b16 %v1375
          %v1382 = vpack.c.b16 %v1378, %v1378
          %v1383 = vpack.c.b16 %v1379, %v1379
          %v1384 = vpack.c.b16 %v1380, %v1380
          %v1385 = vpack.c.b16 %v1381, %v1381
          %1390 = vst [vmem:[%s470] sm:$0xf] %v1382
          %1391 = vst [vmem:[%s470 + $0x4] sm:$0xf] %v1383
          %1392 = vst [vmem:[%s470 + $0x8] sm:$0xf] %v1384
          %1393 = vst [vmem:[%s470 + $0xc] sm:$0xf] %v1385
        $region121: #{tpu_custom_call.1} parent=96 // pred_fallthru
          _
        %s1394 = sand.u32 %s284, 1
        %s1395 = scalar_lea.sflag [#allocation8], %s1394
        %s1396 = sand.u32 %s284, 1
        %s1397 = smul.addr %s1396, 16
        %s1398 = scalar_lea.vmem [#allocation9], %s1397
        // Predicated region
        $region122: #{tpu_custom_call.1} parent=96 // pred_check
          %p1399 = pneg %p294
        $region123: #{tpu_custom_call.1} parent=96 // pred_check_branch
          %1401 = sbr.rel (%p1399) target = $region125
        $region124: #{tpu_custom_call.1} parent=96 // pred_region
          %s1402 = smul.u32 %s31, %s32
          %s1404 = ssub.s32 256, 256
          %1405 = vsyncadd %s1395, %s1404
          %s1406 = smul.addr %s30, 8
          %s1407 = sadd.s32 %s1402, %s1406
          %s1408 = smul.addr %s1407, 64
          %s1409 = scalar_lea.hbm %s10, %s1408
          %s1410 = sshll.u32 %s1398, 4
          %s1411 = int_to_ptr.vmem [resolvable:$true] %s1410
          %1416 = dma.vmem_to_hbm [thread:$0]  %s1411, 256, %s1409, %s1395, 64, 128, 4
        $region125: #{tpu_custom_call.1} parent=96 // pred_fallthru
          _
      $region97: #{tpu_custom_call.1} parent=5 // pred_fallthru
        _
      %p1417 = scmp.le.s32.totalorder 2, %s20
      // Predicated region
      $region126: #{tpu_custom_call.1} parent=5 // pred_check
        %p1418 = pneg %p1417
      $region127: #{tpu_custom_call.1} parent=5 // pred_check_branch
        %1420 = sbr.rel (%p1418) target = $region129
      $region128: #{tpu_custom_call.1} parent=5 // pred_region
        %s1421 = ssub.s32 %s20, 2
        // Predicated region
        $region130: #{tpu_custom_call.1} parent=128 // pred_check
          %p1422 = pneg %p300
        $region131: #{tpu_custom_call.1} parent=128 // pred_check_branch
          %1424 = sbr.rel (%p1422) target = $region133
        $region132: #{tpu_custom_call.1} parent=128 // pred_region
          %s1425 = sand.u32 %s285, 1
          %s1426 = scalar_lea.sflag [#allocation8], %s1425
          %s1427 = sand.u32 %s285, 1
          %s1428 = smul.addr %s1427, 16
          %s1429 = scalar_lea.vmem [#allocation9], %s1428
          %1430 = dma.done %s1426, 256
        $region133: #{tpu_custom_call.1} parent=128 // pred_fallthru
          _
      $region129: #{tpu_custom_call.1} parent=5 // pred_fallthru
        _
    $region6: #{tpu_custom_call.1} parent=1 // loop_footer
      %s24 = sadd.s32 1, %s20
    $region7: #{tpu_custom_call.1} parent=1 // loop_footer_branch
      %19 = sbr.rel target = $region3
    $region8: #{tpu_custom_call.1} parent=1 // loop_exit
      _
    %1431 = vsyncpa [#allocation7], 1
    %s1432 = scalar_lea.sflag [#allocation7], 1
    %1433 = vsyncpa %s1432, 1
    %1434 = vsyncpa [#allocation8], 1
    %s1435 = scalar_lea.sflag [#allocation8], 1
    %1436 = vsyncpa %s1435, 1

</llo_original>
